<compile_context>
chip_gen: v7x
topology: tpu7x:2x2x1
jax: 0.10.0
libtpu: 0.0.40
codegen_flags: <defaults>
</compile_context>

<pallas_src>
import jax
import jax.numpy as jnp
from jax.experimental import pallas as pl
from jax.experimental.pallas import tpu as pltpu

INP_DIM = 32 * 32 * 3   # 3072
MID_DIM = 2 ** 8        # 256
OUT_DIM = 10
TM_MAX = 1024           # batch tile; ~35 MiB peak VMEM (safe on v7x 64 MiB/TC)
VMEM_LIMIT = 48 << 20   # explicit scoped-VMEM budget (default is 16/32 MiB)


def fcnet_kernel(x_ref, w1_ref, w2_ref, o_ref):
    # x_ref:  (TM, 3072) f32 or bf16    w1_ref: (3072, 256) bf16
    # w2_ref: (256, 10)  bf16           o_ref:  (TM, 10)    f32
    #
    # NOTE: rows of the ragged last tile beyond N hold uninitialized VMEM, so
    # exp/max may produce inf/NaN for those rows; they are never stored
    # (masked partial store), so this is harmless -- do not "fix" it.
    x_bf16 = x_ref[...].astype(jnp.bfloat16)
    h = jnp.dot(x_bf16, w1_ref[...], preferred_element_type=jnp.float32)
    # (eval-mode dropout == identity)
    logits = jnp.dot(h.astype(jnp.bfloat16), w2_ref[...],
                     preferred_element_type=jnp.float32)        # (TM, 10)

    # log_softmax along dim=1 (numerically stable, f32)
    m = jnp.max(logits, axis=-1, keepdims=True)
    shifted = logits - m
    lse = jnp.log(jnp.sum(jnp.exp(shifted), axis=-1, keepdims=True))
    o_ref[...] = (shifted - lse).astype(o_ref.dtype)


def _round_up(a, b):
    return ((a + b - 1) // b) * b


def prepare_params(w1, w2):
    """One-time conversion of f32 (fan_in, fan_out) weights to kernel layout."""
    return w1.astype(jnp.bfloat16), w2.astype(jnp.bfloat16)


@jax.jit
def fcnet_forward(x, w1_bf16, w2_bf16):
    """x: (N, 3, 32, 32) f32 (or bf16 to halve HBM traffic).
    w1_bf16: (3072, 256) bf16. w2_bf16: (256, 10) bf16 (see prepare_params).

    Returns (N, 10) f32 log-probabilities (matches torch FCNet in eval mode).
    """
    n = x.shape[0]
    x_flat = x.reshape(-1, INP_DIM)                 # == torch x.view(-1, inp_dim)

    # Tile selection: >= 2 grid steps whenever possible (both v7x TensorCores
    # get work), capped at TM_MAX so VMEM stays ~35 MiB on every generation.
    tm = min(TM_MAX, max(8, _round_up(pl.cdiv(n, 2), 8)))
    grid = (pl.cdiv(n, tm),)

    x_bytes = x_flat.dtype.itemsize
    cost = pl.CostEstimate(
        flops=2 * n * INP_DIM * MID_DIM + 2 * n * MID_DIM * OUT_DIM,
        transcendentals=n * (OUT_DIM + 1),
        bytes_accessed=(n * INP_DIM * x_bytes + INP_DIM * MID_DIM * 2
                        + MID_DIM * OUT_DIM * 2 + n * OUT_DIM * 4),
    )

    return pl.pallas_call(
        fcnet_kernel,
        out_shape=jax.ShapeDtypeStruct((n, OUT_DIM), jnp.float32),
        grid=grid,
        in_specs=[
            pl.BlockSpec((tm, INP_DIM), lambda i: (i, 0)),       # streamed x tile
            pl.BlockSpec((INP_DIM, MID_DIM), lambda i: (0, 0)),  # resident w1
            pl.BlockSpec((MID_DIM, OUT_DIM), lambda i: (0, 0)),  # resident w2
        ],
        out_specs=pl.BlockSpec((tm, OUT_DIM), lambda i: (i, 0)), # direct (N,10)
        compiler_params=pltpu.CompilerParams(
            dimension_semantics=("parallel",),                   # megacore on v7x
            vmem_limit_bytes=VMEM_LIMIT),
        cost_estimate=cost,
    )(x_flat, w1_bf16, w2_bf16)


def init_params(key):
    # Deterministic init mimicking nn.Linear's uniform(-1/sqrt(fan_in), ...),
    # stored in (fan_in, fan_out) layout so the kernel computes x @ w1 @ w2.
    k1, k2 = jax.random.split(key)
    b1 = 1.0 / (INP_DIM ** 0.5)
    b2 = 1.0 / (MID_DIM ** 0.5)
    w1 = jax.random.uniform(k1, (INP_DIM, MID_DIM), jnp.float32, -b1, b1)
    w2 = jax.random.uniform(k2, (MID_DIM, OUT_DIM), jnp.float32, -b2, b2)
    return w1, w2


if __name__ == "__main__":
    key = jax.random.PRNGKey(0)
    kx, kp = jax.random.split(key)

    # small batch; input must be 32x32x3 to match the module's fixed inp_dim
    x = jax.random.normal(kx, (2, 3, 32, 32), jnp.float32)
    w1, w2 = init_params(kp)
    w1_k, w2_k = prepare_params(w1, w2)             # one-time weight layout/cast

    out = fcnet_forward(x, w1_k, w2_k)
    out = jax.block_until_ready(out)

    # reference (pure f32, eval-mode dropout = identity)
    ref_logits = x.reshape(-1, INP_DIM) @ w1 @ w2
    ref = jax.nn.log_softmax(ref_logits, axis=1)

    assert out.shape == (2, OUT_DIM)
    row_sums = jnp.sum(jnp.exp(out), axis=1)
    assert bool(jnp.all(jnp.abs(row_sums - 1.0) < 1e-4))
    # bf16 GEMMs with f32 accumulation: loose tolerance vs f32 reference
    assert bool(jnp.max(jnp.abs(out - ref)) < 5e-2)

    print("KERNEL_OK")
</pallas_src>

<mosaic_0001>
module attributes {stable_mosaic.version = 11 : i64} {
  func.func @fcnet_kernel(%arg0: i32, %arg1: memref<8x3072xf32, #tpu.memory_space<vmem>>, %arg2: memref<3072x256xbf16, #tpu.memory_space<vmem>>, %arg3: memref<256x10xbf16, #tpu.memory_space<vmem>>, %arg4: memref<8x10xf32, #tpu.memory_space<vmem>>) attributes {dimension_semantics = [#tpu.dimension_semantics<parallel>], iteration_bounds = array<i64: 1>, scalar_prefetch = 0 : i64, scratch_operands = 0 : i64, tpu.core_type = #tpu.core_type<tc>, window_params = [{transform_indices = @transform_0, window_bounds = array<i64: 8, 3072>}, {pipeline_mode = #tpu.pipeline_mode<synchronous>, transform_indices = @transform_1, window_bounds = array<i64: 3072, 256>}, {pipeline_mode = #tpu.pipeline_mode<synchronous>, transform_indices = @transform_2, window_bounds = array<i64: 256, 10>}, {transform_indices = @transform_3, window_bounds = array<i64: 8, 10>}]} {
    %c0 = arith.constant 0 : index
    %c0_0 = arith.constant 0 : index
    %0 = vector.load %arg1[%c0, %c0_0] : memref<8x3072xf32, #tpu.memory_space<vmem>>, vector<8x3072xf32>
    %1 = arith.truncf %0 : vector<8x3072xf32> to vector<8x3072xbf16>
    %c0_1 = arith.constant 0 : index
    %c0_2 = arith.constant 0 : index
    %2 = vector.load %arg2[%c0_1, %c0_2] : memref<3072x256xbf16, #tpu.memory_space<vmem>>, vector<3072x256xbf16>
    %cst = arith.constant dense<0.000000e+00> : vector<8x256xf32>
    %3 = tpu.matmul %1, %2, %cst {dimension_numbers = #tpu.dot_dimension_numbers<[1], [0], [0], [1], [0, 0, 1, 1], [], []>} : vector<8x3072xbf16>, vector<3072x256xbf16>, vector<8x256xf32> -> vector<8x256xf32>
    %4 = arith.truncf %3 : vector<8x256xf32> to vector<8x256xbf16>
    %c0_3 = arith.constant 0 : index
    %c0_4 = arith.constant 0 : index
    %5 = vector.load %arg3[%c0_3, %c0_4] : memref<256x10xbf16, #tpu.memory_space<vmem>>, vector<256x10xbf16>
    %cst_5 = arith.constant dense<0.000000e+00> : vector<8x10xf32>
    %6 = tpu.matmul %4, %5, %cst_5 {dimension_numbers = #tpu.dot_dimension_numbers<[1], [0], [0], [1], [0, 0, 1, 1], [], []>} : vector<8x256xbf16>, vector<256x10xbf16>, vector<8x10xf32> -> vector<8x10xf32>
    %cst_6 = arith.constant dense<0xFF800000> : vector<8xf32>
    %7 = vector.multi_reduction <maximumf>, %6, %cst_6 [1] : vector<8x10xf32> to vector<8xf32>
    %8 = vector.shape_cast %7 : vector<8xf32> to vector<8x1xf32>
    %9 = vector.broadcast %8 : vector<8x1xf32> to vector<8x10xf32>
    %10 = arith.subf %6, %9 : vector<8x10xf32>
    %11 = math.exp %10 : vector<8x10xf32>
    %cst_7 = arith.constant dense<0.000000e+00> : vector<8xf32>
    %12 = vector.multi_reduction <add>, %11, %cst_7 [1] : vector<8x10xf32> to vector<8xf32>
    %13 = vector.shape_cast %12 : vector<8xf32> to vector<8x1xf32>
    %14 = math.log %13 : vector<8x1xf32>
    %15 = vector.broadcast %14 : vector<8x1xf32> to vector<8x10xf32>
    %16 = arith.subf %10, %15 : vector<8x10xf32>
    %c0_8 = arith.constant 0 : index
    %c0_9 = arith.constant 0 : index
    %17 = vector.load %arg4[%c0_8, %c0_9] : memref<8x10xf32, #tpu.memory_space<vmem>>, vector<8x10xf32>
    tpu.vector_store %arg4[%c0_8, %c0_9], %16 {strides = array<i32>} : memref<8x10xf32, #tpu.memory_space<vmem>>, vector<8x10xf32>,
    return
  }
  func.func @transform_0(%arg0: i32) -> (i32, i32) {
    %c0_i32 = arith.constant 0 : i32
    %c0_i32_0 = arith.constant 0 : i32
    return %arg0, %c0_i32 : i32, i32
  }
  func.func @transform_1(%arg0: i32) -> (i32, i32) {
    %c0_i32 = arith.constant 0 : i32
    %c0_i32_0 = arith.constant 0 : i32
    %c0_i32_1 = arith.constant 0 : i32
    return %c0_i32, %c0_i32_0 : i32, i32
  }
  func.func @transform_2(%arg0: i32) -> (i32, i32) {
    %c0_i32 = arith.constant 0 : i32
    %c0_i32_0 = arith.constant 0 : i32
    %c0_i32_1 = arith.constant 0 : i32
    return %c0_i32, %c0_i32_0 : i32, i32
  }
  func.func @transform_3(%arg0: i32) -> (i32, i32) {
    %c0_i32 = arith.constant 0 : i32
    %c0_i32_0 = arith.constant 0 : i32
    return %arg0, %c0_i32 : i32, i32
  }
}

</mosaic_0001>

<llo_original>
// kernel: fcnet_forward.1
$region0: #{fcnet_forward.1}
  #allocation0 [shape = 'u32[]', space=smem, size = 0x4, offset = 0x4, fixed_abs, tag = 'smem constant byte address 0x4 - core index']
  #allocation1 [shape = 'u32[144,128]{1,0:T(1,128)}', space=vmem, size = 0x12000, scoped, tag = 'internal scratch']
  %s0 = inlined_call_operand.vmem [shape: f32[2,3072], index: 0, kind: input, shape index: {}]
  %s1 = inlined_call_operand.hbm [shape: bf16[3072,256], index: 1, kind: input, shape index: {}]
  %s2 = inlined_call_operand.vmem [shape: bf16[256,10], index: 2, kind: input, shape index: {}]
  %s3 = inlined_call_operand.hbm [shape: f32[2,10], index: 3, kind: output, shape index: {}]
  %s4 = sld [smem:[#allocation0]]
  $region26: #{fcnet_forward.1} parent=0
    _
  %s6 = ssub.s32 1, %s4
  %s7 = scalar_select 0, %s6, %s4
  $region1: #{fcnet_forward.1} parent=0
    #allocation2 [shape = 'u8[1572864]{0}', space=vmem, size = 0x180000, scoped, tag = 'input window, operand 1, single buffered']
    #allocation3 [shape = 's32[1]{0}', space=sflag, size = 0x4, scoped, tag = 'scoped memory for fcnet_forward.1']
    #allocation4 [shape = 's32[1]{0}', space=sflag, size = 0x4, scoped, tag = 'scoped memory for fcnet_forward.1']
    #allocation5 [shape = 'u8[4096]{0}', space=vmem, size = 0x1000, scoped, tag = 'output window, operand 0, single buffered']
    %8 = vsyncpa [#allocation3], 0
    %9 = vsyncpa [#allocation4], 0
    // Predicated region
    $region2: #{fcnet_forward.1} parent=1 // pred_check
      _
    $region3: #{fcnet_forward.1} parent=1 // pred_check_branch
      %11 = sbr.rel (0) target = $region5
    $region4: #{fcnet_forward.1} parent=1 // pred_region
      _
    $region5: #{fcnet_forward.1} parent=1 // pred_fallthru
      _
    // Predicated region
    $region6: #{fcnet_forward.1} parent=1 // pred_check
      _
    $region7: #{fcnet_forward.1} parent=1 // pred_check_branch
      %13 = sbr.rel (0) target = $region9
    $region8: #{fcnet_forward.1} parent=1 // pred_region
      %s15 = ssub.s32 49152, 49152
      %16 = vsyncadd [#allocation3], %s15
      %s17 = sshll.u32 [#allocation2], 4
      %s18 = int_to_ptr.vmem [resolvable:$true] %s17
      %23 = dma.hbm_to_vmem [thread:$0]  %s1, 49152, %s18, [#allocation3], 128, 128, 8
    $region9: #{fcnet_forward.1} parent=1 // pred_fallthru
      _
    // Predicated region
    $region10: #{fcnet_forward.1} parent=1 // pred_check
      _
    $region11: #{fcnet_forward.1} parent=1 // pred_check_branch
      %25 = sbr.rel (0) target = $region13
    $region12: #{fcnet_forward.1} parent=1 // pred_region
      _
    $region13: #{fcnet_forward.1} parent=1 // pred_fallthru
      _
    // Predicated region
    $region14: #{fcnet_forward.1} parent=1 // pred_check
      _
    $region15: #{fcnet_forward.1} parent=1 // pred_check_branch
      %27 = sbr.rel (0) target = $region17
    $region16: #{fcnet_forward.1} parent=1 // pred_region
      %28 = dma.done [#allocation3], 49152
    $region17: #{fcnet_forward.1} parent=1 // pred_fallthru
      _
    %v30 = vld [vmem:[%s0] sm:$0xff]
    %v31 = vld [vmem:[%s0 + $0x8] sm:$0xff]
    %v32 = vld [vmem:[%s0 + $0x10] sm:$0xff]
    %v33 = vld [vmem:[%s0 + $0x18] sm:$0xff]
    %v34 = vld [vmem:[%s0 + $0x20] sm:$0xff]
    %v35 = vld [vmem:[%s0 + $0x28] sm:$0xff]
    %v36 = vld [vmem:[%s0 + $0x30] sm:$0xff]
    %v37 = vld [vmem:[%s0 + $0x38] sm:$0xff]
    %v38 = vld [vmem:[%s0 + $0x40] sm:$0xff]
    %v39 = vld [vmem:[%s0 + $0x48] sm:$0xff]
    %v40 = vld [vmem:[%s0 + $0x50] sm:$0xff]
    %v41 = vld [vmem:[%s0 + $0x58] sm:$0xff]
    %v42 = vld [vmem:[%s0 + $0x60] sm:$0xff]
    %v43 = vld [vmem:[%s0 + $0x68] sm:$0xff]
    %v44 = vld [vmem:[%s0 + $0x70] sm:$0xff]
    %v45 = vld [vmem:[%s0 + $0x78] sm:$0xff]
    %v46 = vld [vmem:[%s0 + $0x80] sm:$0xff]
    %v47 = vld [vmem:[%s0 + $0x88] sm:$0xff]
    %v48 = vld [vmem:[%s0 + $0x90] sm:$0xff]
    %v49 = vld [vmem:[%s0 + $0x98] sm:$0xff]
    %v50 = vld [vmem:[%s0 + $0xa0] sm:$0xff]
    %v51 = vld [vmem:[%s0 + $0xa8] sm:$0xff]
    %v52 = vld [vmem:[%s0 + $0xb0] sm:$0xff]
    %v53 = vld [vmem:[%s0 + $0xb8] sm:$0xff]
    %v78 = vcombine.low %v30, %v36
    %v79 = vcombine.high %v30, %v36
    %v80 = vcombine.low %v42, %v48
    %v81 = vcombine.high %v42, %v48
    %v83 = vunpack.c.l.s4 1983009808
    %v84 = vunpack.c.0.s8 %v83
    %v85 = vlaneseq
    %v86 = vshrl.u32 %v85, 7
    %v87 = vsub.s32 %v84, %v86
    %v88 = vrot.slane %v78, %v87
    %v90 = vunpack.c.l.s4 1983009808
    %v91 = vunpack.c.0.s8 %v90
    %v92 = vlaneseq
    %v93 = vshrl.u32 %v92, 7
    %v94 = vsub.s32 %v91, %v93
    %v95 = vrot.slane %v79, %v94
    %v97 = vunpack.c.l.s4 1983009808
    %v98 = vunpack.c.0.s8 %v97
    %v99 = vlaneseq
    %v100 = vshrl.u32 %v99, 7
    %v101 = vsub.s32 %v98, %v100
    %v102 = vrot.slane %v80, %v101
    %v104 = vunpack.c.l.s4 1983009808
    %v105 = vunpack.c.0.s8 %v104
    %v106 = vlaneseq
    %v107 = vshrl.u32 %v106, 7
    %v108 = vsub.s32 %v105, %v107
    %v109 = vrot.slane %v81, %v108
    %v110 = vcombine.low %v88, %v102
    %v111 = vcombine.high %v88, %v102
    %v112 = vcombine.low %v95, %v109
    %v113 = vcombine.high %v95, %v109
    %v114 = vcombine.low %v31, %v37
    %v115 = vcombine.high %v31, %v37
    %v116 = vcombine.low %v43, %v49
    %v117 = vcombine.high %v43, %v49
    %v119 = vunpack.c.l.s4 1983009808
    %v120 = vunpack.c.0.s8 %v119
    %v121 = vlaneseq
    %v122 = vshrl.u32 %v121, 7
    %v123 = vsub.s32 %v120, %v122
    %v124 = vrot.slane %v114, %v123
    %v126 = vunpack.c.l.s4 1983009808
    %v127 = vunpack.c.0.s8 %v126
    %v128 = vlaneseq
    %v129 = vshrl.u32 %v128, 7
    %v130 = vsub.s32 %v127, %v129
    %v131 = vrot.slane %v115, %v130
    %v133 = vunpack.c.l.s4 1983009808
    %v134 = vunpack.c.0.s8 %v133
    %v135 = vlaneseq
    %v136 = vshrl.u32 %v135, 7
    %v137 = vsub.s32 %v134, %v136
    %v138 = vrot.slane %v116, %v137
    %v140 = vunpack.c.l.s4 1983009808
    %v141 = vunpack.c.0.s8 %v140
    %v142 = vlaneseq
    %v143 = vshrl.u32 %v142, 7
    %v144 = vsub.s32 %v141, %v143
    %v145 = vrot.slane %v117, %v144
    %v146 = vcombine.low %v124, %v138
    %v147 = vcombine.high %v124, %v138
    %v148 = vcombine.low %v131, %v145
    %v149 = vcombine.high %v131, %v145
    %v150 = vcombine.low %v32, %v38
    %v151 = vcombine.high %v32, %v38
    %v152 = vcombine.low %v44, %v50
    %v153 = vcombine.high %v44, %v50
    %v155 = vunpack.c.l.s4 1983009808
    %v156 = vunpack.c.0.s8 %v155
    %v157 = vlaneseq
    %v158 = vshrl.u32 %v157, 7
    %v159 = vsub.s32 %v156, %v158
    %v160 = vrot.slane %v150, %v159
    %v162 = vunpack.c.l.s4 1983009808
    %v163 = vunpack.c.0.s8 %v162
    %v164 = vlaneseq
    %v165 = vshrl.u32 %v164, 7
    %v166 = vsub.s32 %v163, %v165
    %v167 = vrot.slane %v151, %v166
    %v169 = vunpack.c.l.s4 1983009808
    %v170 = vunpack.c.0.s8 %v169
    %v171 = vlaneseq
    %v172 = vshrl.u32 %v171, 7
    %v173 = vsub.s32 %v170, %v172
    %v174 = vrot.slane %v152, %v173
    %v176 = vunpack.c.l.s4 1983009808
    %v177 = vunpack.c.0.s8 %v176
    %v178 = vlaneseq
    %v179 = vshrl.u32 %v178, 7
    %v180 = vsub.s32 %v177, %v179
    %v181 = vrot.slane %v153, %v180
    %v182 = vcombine.low %v160, %v174
    %v183 = vcombine.high %v160, %v174
    %v184 = vcombine.low %v167, %v181
    %v185 = vcombine.high %v167, %v181
    %v186 = vcombine.low %v33, %v39
    %v187 = vcombine.high %v33, %v39
    %v188 = vcombine.low %v45, %v51
    %v189 = vcombine.high %v45, %v51
    %v191 = vunpack.c.l.s4 1983009808
    %v192 = vunpack.c.0.s8 %v191
    %v193 = vlaneseq
    %v194 = vshrl.u32 %v193, 7
    %v195 = vsub.s32 %v192, %v194
    %v196 = vrot.slane %v186, %v195
    %v198 = vunpack.c.l.s4 1983009808
    %v199 = vunpack.c.0.s8 %v198
    %v200 = vlaneseq
    %v201 = vshrl.u32 %v200, 7
    %v202 = vsub.s32 %v199, %v201
    %v203 = vrot.slane %v187, %v202
    %v205 = vunpack.c.l.s4 1983009808
    %v206 = vunpack.c.0.s8 %v205
    %v207 = vlaneseq
    %v208 = vshrl.u32 %v207, 7
    %v209 = vsub.s32 %v206, %v208
    %v210 = vrot.slane %v188, %v209
    %v212 = vunpack.c.l.s4 1983009808
    %v213 = vunpack.c.0.s8 %v212
    %v214 = vlaneseq
    %v215 = vshrl.u32 %v214, 7
    %v216 = vsub.s32 %v213, %v215
    %v217 = vrot.slane %v189, %v216
    %v218 = vcombine.low %v196, %v210
    %v219 = vcombine.high %v196, %v210
    %v220 = vcombine.low %v203, %v217
    %v221 = vcombine.high %v203, %v217
    %v222 = vcombine.low %v34, %v40
    %v223 = vcombine.high %v34, %v40
    %v224 = vcombine.low %v46, %v52
    %v225 = vcombine.high %v46, %v52
    %v227 = vunpack.c.l.s4 1983009808
    %v228 = vunpack.c.0.s8 %v227
    %v229 = vlaneseq
    %v230 = vshrl.u32 %v229, 7
    %v231 = vsub.s32 %v228, %v230
    %v232 = vrot.slane %v222, %v231
    %v234 = vunpack.c.l.s4 1983009808
    %v235 = vunpack.c.0.s8 %v234
    %v236 = vlaneseq
    %v237 = vshrl.u32 %v236, 7
    %v238 = vsub.s32 %v235, %v237
    %v239 = vrot.slane %v223, %v238
    %v241 = vunpack.c.l.s4 1983009808
    %v242 = vunpack.c.0.s8 %v241
    %v243 = vlaneseq
    %v244 = vshrl.u32 %v243, 7
    %v245 = vsub.s32 %v242, %v244
    %v246 = vrot.slane %v224, %v245
    %v248 = vunpack.c.l.s4 1983009808
    %v249 = vunpack.c.0.s8 %v248
    %v250 = vlaneseq
    %v251 = vshrl.u32 %v250, 7
    %v252 = vsub.s32 %v249, %v251
    %v253 = vrot.slane %v225, %v252
    %v254 = vcombine.low %v232, %v246
    %v255 = vcombine.high %v232, %v246
    %v256 = vcombine.low %v239, %v253
    %v257 = vcombine.high %v239, %v253
    %v258 = vcombine.low %v35, %v41
    %v259 = vcombine.high %v35, %v41
    %v260 = vcombine.low %v47, %v53
    %v261 = vcombine.high %v47, %v53
    %v263 = vunpack.c.l.s4 1983009808
    %v264 = vunpack.c.0.s8 %v263
    %v265 = vlaneseq
    %v266 = vshrl.u32 %v265, 7
    %v267 = vsub.s32 %v264, %v266
    %v268 = vrot.slane %v258, %v267
    %v270 = vunpack.c.l.s4 1983009808
    %v271 = vunpack.c.0.s8 %v270
    %v272 = vlaneseq
    %v273 = vshrl.u32 %v272, 7
    %v274 = vsub.s32 %v271, %v273
    %v275 = vrot.slane %v259, %v274
    %v277 = vunpack.c.l.s4 1983009808
    %v278 = vunpack.c.0.s8 %v277
    %v279 = vlaneseq
    %v280 = vshrl.u32 %v279, 7
    %v281 = vsub.s32 %v278, %v280
    %v282 = vrot.slane %v260, %v281
    %v284 = vunpack.c.l.s4 1983009808
    %v285 = vunpack.c.0.s8 %v284
    %v286 = vlaneseq
    %v287 = vshrl.u32 %v286, 7
    %v288 = vsub.s32 %v285, %v287
    %v289 = vrot.slane %v261, %v288
    %v290 = vcombine.low %v268, %v282
    %v291 = vcombine.high %v268, %v282
    %v292 = vcombine.low %v275, %v289
    %v293 = vcombine.high %v275, %v289
    %v318 = vpack.c.bf16 %v110, %v110
    %v319 = vpack.c.bf16 %v111, %v111
    %v320 = vpack.c.bf16 %v112, %v112
    %v321 = vpack.c.bf16 %v113, %v113
    %v322 = vpack.c.bf16 %v146, %v146
    %v323 = vpack.c.bf16 %v147, %v147
    %v324 = vpack.c.bf16 %v148, %v148
    %v325 = vpack.c.bf16 %v149, %v149
    %v326 = vpack.c.bf16 %v182, %v182
    %v327 = vpack.c.bf16 %v183, %v183
    %v328 = vpack.c.bf16 %v184, %v184
    %v329 = vpack.c.bf16 %v185, %v185
    %v330 = vpack.c.bf16 %v218, %v218
    %v331 = vpack.c.bf16 %v219, %v219
    %v332 = vpack.c.bf16 %v220, %v220
    %v333 = vpack.c.bf16 %v221, %v221
    %v334 = vpack.c.bf16 %v254, %v254
    %v335 = vpack.c.bf16 %v255, %v255
    %v336 = vpack.c.bf16 %v256, %v256
    %v337 = vpack.c.bf16 %v257, %v257
    %v338 = vpack.c.bf16 %v290, %v290
    %v339 = vpack.c.bf16 %v291, %v291
    %v340 = vpack.c.bf16 %v292, %v292
    %v341 = vpack.c.bf16 %v293, %v293
    %v342 = vld [vmem:[#allocation2] sm:$0xff]
    %v343 = vld [vmem:[#allocation2 + $0x8] sm:$0xff]
    %v344 = vld [vmem:[#allocation2 + $0x10] sm:$0xff]
    %v345 = vld [vmem:[#allocation2 + $0x18] sm:$0xff]
    %v346 = vld [vmem:[#allocation2 + $0x20] sm:$0xff]
    %v347 = vld [vmem:[#allocation2 + $0x28] sm:$0xff]
    %v348 = vld [vmem:[#allocation2 + $0x30] sm:$0xff]
    %v349 = vld [vmem:[#allocation2 + $0x38] sm:$0xff]
    %v350 = vld [vmem:[#allocation2 + $0x40] sm:$0xff]
    %v351 = vld [vmem:[#allocation2 + $0x48] sm:$0xff]
    %v352 = vld [vmem:[#allocation2 + $0x50] sm:$0xff]
    %v353 = vld [vmem:[#allocation2 + $0x58] sm:$0xff]
    %v354 = vld [vmem:[#allocation2 + $0x60] sm:$0xff]
    %v355 = vld [vmem:[#allocation2 + $0x68] sm:$0xff]
    %v356 = vld [vmem:[#allocation2 + $0x70] sm:$0xff]
    %v357 = vld [vmem:[#allocation2 + $0x78] sm:$0xff]
    %v358 = vld [vmem:[#allocation2 + $0x80] sm:$0xff]
    %v359 = vld [vmem:[#allocation2 + $0x88] sm:$0xff]
    %v360 = vld [vmem:[#allocation2 + $0x90] sm:$0xff]
    %v361 = vld [vmem:[#allocation2 + $0x98] sm:$0xff]
    %v362 = vld [vmem:[#allocation2 + $0xa0] sm:$0xff]
    %v363 = vld [vmem:[#allocation2 + $0xa8] sm:$0xff]
    %v364 = vld [vmem:[#allocation2 + $0xb0] sm:$0xff]
    %v365 = vld [vmem:[#allocation2 + $0xb8] sm:$0xff]
    %v366 = vld [vmem:[#allocation2 + $0xc0] sm:$0xff]
    %v367 = vld [vmem:[#allocation2 + $0xc8] sm:$0xff]
    %v368 = vld [vmem:[#allocation2 + $0xd0] sm:$0xff]
    %v369 = vld [vmem:[#allocation2 + $0xd8] sm:$0xff]
    %v370 = vld [vmem:[#allocation2 + $0xe0] sm:$0xff]
    %v371 = vld [vmem:[#allocation2 + $0xe8] sm:$0xff]
    %v372 = vld [vmem:[#allocation2 + $0xf0] sm:$0xff]
    %v373 = vld [vmem:[#allocation2 + $0xf8] sm:$0xff]
    %v374 = vld [vmem:[#allocation2 + $0x100] sm:$0xff]
    %v375 = vld [vmem:[#allocation2 + $0x108] sm:$0xff]
    %v376 = vld [vmem:[#allocation2 + $0x110] sm:$0xff]
    %v377 = vld [vmem:[#allocation2 + $0x118] sm:$0xff]
    %v378 = vld [vmem:[#allocation2 + $0x120] sm:$0xff]
    %v379 = vld [vmem:[#allocation2 + $0x128] sm:$0xff]
    %v380 = vld [vmem:[#allocation2 + $0x130] sm:$0xff]
    %v381 = vld [vmem:[#allocation2 + $0x138] sm:$0xff]
    %v382 = vld [vmem:[#allocation2 + $0x140] sm:$0xff]
    %v383 = vld [vmem:[#allocation2 + $0x148] sm:$0xff]
    %v384 = vld [vmem:[#allocation2 + $0x150] sm:$0xff]
    %v385 = vld [vmem:[#allocation2 + $0x158] sm:$0xff]
    %v386 = vld [vmem:[#allocation2 + $0x160] sm:$0xff]
    %v387 = vld [vmem:[#allocation2 + $0x168] sm:$0xff]
    %v388 = vld [vmem:[#allocation2 + $0x170] sm:$0xff]
    %v389 = vld [vmem:[#allocation2 + $0x178] sm:$0xff]
    %v390 = vld [vmem:[#allocation2 + $0x180] sm:$0xff]
    %v391 = vld [vmem:[#allocation2 + $0x188] sm:$0xff]
    %v392 = vld [vmem:[#allocation2 + $0x190] sm:$0xff]
    %v393 = vld [vmem:[#allocation2 + $0x198] sm:$0xff]
    %v394 = vld [vmem:[#allocation2 + $0x1a0] sm:$0xff]
    %v395 = vld [vmem:[#allocation2 + $0x1a8] sm:$0xff]
    %v396 = vld [vmem:[#allocation2 + $0x1b0] sm:$0xff]
    %v397 = vld [vmem:[#allocation2 + $0x1b8] sm:$0xff]
    %v398 = vld [vmem:[#allocation2 + $0x1c0] sm:$0xff]
    %v399 = vld [vmem:[#allocation2 + $0x1c8] sm:$0xff]
    %v400 = vld [vmem:[#allocation2 + $0x1d0] sm:$0xff]
    %v401 = vld [vmem:[#allocation2 + $0x1d8] sm:$0xff]
    %v402 = vld [vmem:[#allocation2 + $0x1e0] sm:$0xff]
    %v403 = vld [vmem:[#allocation2 + $0x1e8] sm:$0xff]
    %v404 = vld [vmem:[#allocation2 + $0x1f0] sm:$0xff]
    %v405 = vld [vmem:[#allocation2 + $0x1f8] sm:$0xff]
    %v406 = vld [vmem:[#allocation2 + $0x200] sm:$0xff]
    %v407 = vld [vmem:[#allocation2 + $0x208] sm:$0xff]
    %v408 = vld [vmem:[#allocation2 + $0x210] sm:$0xff]
    %v409 = vld [vmem:[#allocation2 + $0x218] sm:$0xff]
    %v410 = vld [vmem:[#allocation2 + $0x220] sm:$0xff]
    %v411 = vld [vmem:[#allocation2 + $0x228] sm:$0xff]
    %v412 = vld [vmem:[#allocation2 + $0x230] sm:$0xff]
    %v413 = vld [vmem:[#allocation2 + $0x238] sm:$0xff]
    %v414 = vld [vmem:[#allocation2 + $0x240] sm:$0xff]
    %v415 = vld [vmem:[#allocation2 + $0x248] sm:$0xff]
    %v416 = vld [vmem:[#allocation2 + $0x250] sm:$0xff]
    %v417 = vld [vmem:[#allocation2 + $0x258] sm:$0xff]
    %v418 = vld [vmem:[#allocation2 + $0x260] sm:$0xff]
    %v419 = vld [vmem:[#allocation2 + $0x268] sm:$0xff]
    %v420 = vld [vmem:[#allocation2 + $0x270] sm:$0xff]
    %v421 = vld [vmem:[#allocation2 + $0x278] sm:$0xff]
    %v422 = vld [vmem:[#allocation2 + $0x280] sm:$0xff]
    %v423 = vld [vmem:[#allocation2 + $0x288] sm:$0xff]
    %v424 = vld [vmem:[#allocation2 + $0x290] sm:$0xff]
    %v425 = vld [vmem:[#allocation2 + $0x298] sm:$0xff]
    %v426 = vld [vmem:[#allocation2 + $0x2a0] sm:$0xff]
    %v427 = vld [vmem:[#allocation2 + $0x2a8] sm:$0xff]
    %v428 = vld [vmem:[#allocation2 + $0x2b0] sm:$0xff]
    %v429 = vld [vmem:[#allocation2 + $0x2b8] sm:$0xff]
    %v430 = vld [vmem:[#allocation2 + $0x2c0] sm:$0xff]
    %v431 = vld [vmem:[#allocation2 + $0x2c8] sm:$0xff]
    %v432 = vld [vmem:[#allocation2 + $0x2d0] sm:$0xff]
    %v433 = vld [vmem:[#allocation2 + $0x2d8] sm:$0xff]
    %v434 = vld [vmem:[#allocation2 + $0x2e0] sm:$0xff]
    %v435 = vld [vmem:[#allocation2 + $0x2e8] sm:$0xff]
    %v436 = vld [vmem:[#allocation2 + $0x2f0] sm:$0xff]
    %v437 = vld [vmem:[#allocation2 + $0x2f8] sm:$0xff]
    %v438 = vld [vmem:[#allocation2 + $0x300] sm:$0xff]
    %v439 = vld [vmem:[#allocation2 + $0x308] sm:$0xff]
    %v440 = vld [vmem:[#allocation2 + $0x310] sm:$0xff]
    %v441 = vld [vmem:[#allocation2 + $0x318] sm:$0xff]
    %v442 = vld [vmem:[#allocation2 + $0x320] sm:$0xff]
    %v443 = vld [vmem:[#allocation2 + $0x328] sm:$0xff]
    %v444 = vld [vmem:[#allocation2 + $0x330] sm:$0xff]
    %v445 = vld [vmem:[#allocation2 + $0x338] sm:$0xff]
    %v446 = vld [vmem:[#allocation2 + $0x340] sm:$0xff]
    %v447 = vld [vmem:[#allocation2 + $0x348] sm:$0xff]
    %v448 = vld [vmem:[#allocation2 + $0x350] sm:$0xff]
    %v449 = vld [vmem:[#allocation2 + $0x358] sm:$0xff]
    %v450 = vld [vmem:[#allocation2 + $0x360] sm:$0xff]
    %v451 = vld [vmem:[#allocation2 + $0x368] sm:$0xff]
    %v452 = vld [vmem:[#allocation2 + $0x370] sm:$0xff]
    %v453 = vld [vmem:[#allocation2 + $0x378] sm:$0xff]
    %v454 = vld [vmem:[#allocation2 + $0x380] sm:$0xff]
    %v455 = vld [vmem:[#allocation2 + $0x388] sm:$0xff]
    %v456 = vld [vmem:[#allocation2 + $0x390] sm:$0xff]
    %v457 = vld [vmem:[#allocation2 + $0x398] sm:$0xff]
    %v458 = vld [vmem:[#allocation2 + $0x3a0] sm:$0xff]
    %v459 = vld [vmem:[#allocation2 + $0x3a8] sm:$0xff]
    %v460 = vld [vmem:[#allocation2 + $0x3b0] sm:$0xff]
    %v461 = vld [vmem:[#allocation2 + $0x3b8] sm:$0xff]
    %v462 = vld [vmem:[#allocation2 + $0x3c0] sm:$0xff]
    %v463 = vld [vmem:[#allocation2 + $0x3c8] sm:$0xff]
    %v464 = vld [vmem:[#allocation2 + $0x3d0] sm:$0xff]
    %v465 = vld [vmem:[#allocation2 + $0x3d8] sm:$0xff]
    %v466 = vld [vmem:[#allocation2 + $0x3e0] sm:$0xff]
    %v467 = vld [vmem:[#allocation2 + $0x3e8] sm:$0xff]
    %v468 = vld [vmem:[#allocation2 + $0x3f0] sm:$0xff]
    %v469 = vld [vmem:[#allocation2 + $0x3f8] sm:$0xff]
    %v470 = vld [vmem:[#allocation2 + $0x400] sm:$0xff]
    %v471 = vld [vmem:[#allocation2 + $0x408] sm:$0xff]
    %v472 = vld [vmem:[#allocation2 + $0x410] sm:$0xff]
    %v473 = vld [vmem:[#allocation2 + $0x418] sm:$0xff]
    %v474 = vld [vmem:[#allocation2 + $0x420] sm:$0xff]
    %v475 = vld [vmem:[#allocation2 + $0x428] sm:$0xff]
    %v476 = vld [vmem:[#allocation2 + $0x430] sm:$0xff]
    %v477 = vld [vmem:[#allocation2 + $0x438] sm:$0xff]
    %v478 = vld [vmem:[#allocation2 + $0x440] sm:$0xff]
    %v479 = vld [vmem:[#allocation2 + $0x448] sm:$0xff]
    %v480 = vld [vmem:[#allocation2 + $0x450] sm:$0xff]
    %v481 = vld [vmem:[#allocation2 + $0x458] sm:$0xff]
    %v482 = vld [vmem:[#allocation2 + $0x460] sm:$0xff]
    %v483 = vld [vmem:[#allocation2 + $0x468] sm:$0xff]
    %v484 = vld [vmem:[#allocation2 + $0x470] sm:$0xff]
    %v485 = vld [vmem:[#allocation2 + $0x478] sm:$0xff]
    %v486 = vld [vmem:[#allocation2 + $0x480] sm:$0xff]
    %v487 = vld [vmem:[#allocation2 + $0x488] sm:$0xff]
    %v488 = vld [vmem:[#allocation2 + $0x490] sm:$0xff]
    %v489 = vld [vmem:[#allocation2 + $0x498] sm:$0xff]
    %v490 = vld [vmem:[#allocation2 + $0x4a0] sm:$0xff]
    %v491 = vld [vmem:[#allocation2 + $0x4a8] sm:$0xff]
    %v492 = vld [vmem:[#allocation2 + $0x4b0] sm:$0xff]
    %v493 = vld [vmem:[#allocation2 + $0x4b8] sm:$0xff]
    %v494 = vld [vmem:[#allocation2 + $0x4c0] sm:$0xff]
    %v495 = vld [vmem:[#allocation2 + $0x4c8] sm:$0xff]
    %v496 = vld [vmem:[#allocation2 + $0x4d0] sm:$0xff]
    %v497 = vld [vmem:[#allocation2 + $0x4d8] sm:$0xff]
    %v498 = vld [vmem:[#allocation2 + $0x4e0] sm:$0xff]
    %v499 = vld [vmem:[#allocation2 + $0x4e8] sm:$0xff]
    %v500 = vld [vmem:[#allocation2 + $0x4f0] sm:$0xff]
    %v501 = vld [vmem:[#allocation2 + $0x4f8] sm:$0xff]
    %v502 = vld [vmem:[#allocation2 + $0x500] sm:$0xff]
    %v503 = vld [vmem:[#allocation2 + $0x508] sm:$0xff]
    %v504 = vld [vmem:[#allocation2 + $0x510] sm:$0xff]
    %v505 = vld [vmem:[#allocation2 + $0x518] sm:$0xff]
    %v506 = vld [vmem:[#allocation2 + $0x520] sm:$0xff]
    %v507 = vld [vmem:[#allocation2 + $0x528] sm:$0xff]
    %v508 = vld [vmem:[#allocation2 + $0x530] sm:$0xff]
    %v509 = vld [vmem:[#allocation2 + $0x538] sm:$0xff]
    %v510 = vld [vmem:[#allocation2 + $0x540] sm:$0xff]
    %v511 = vld [vmem:[#allocation2 + $0x548] sm:$0xff]
    %v512 = vld [vmem:[#allocation2 + $0x550] sm:$0xff]
    %v513 = vld [vmem:[#allocation2 + $0x558] sm:$0xff]
    %v514 = vld [vmem:[#allocation2 + $0x560] sm:$0xff]
    %v515 = vld [vmem:[#allocation2 + $0x568] sm:$0xff]
    %v516 = vld [vmem:[#allocation2 + $0x570] sm:$0xff]
    %v517 = vld [vmem:[#allocation2 + $0x578] sm:$0xff]
    %v518 = vld [vmem:[#allocation2 + $0x580] sm:$0xff]
    %v519 = vld [vmem:[#allocation2 + $0x588] sm:$0xff]
    %v520 = vld [vmem:[#allocation2 + $0x590] sm:$0xff]
    %v521 = vld [vmem:[#allocation2 + $0x598] sm:$0xff]
    %v522 = vld [vmem:[#allocation2 + $0x5a0] sm:$0xff]
    %v523 = vld [vmem:[#allocation2 + $0x5a8] sm:$0xff]
    %v524 = vld [vmem:[#allocation2 + $0x5b0] sm:$0xff]
    %v525 = vld [vmem:[#allocation2 + $0x5b8] sm:$0xff]
    %v526 = vld [vmem:[#allocation2 + $0x5c0] sm:$0xff]
    %v527 = vld [vmem:[#allocation2 + $0x5c8] sm:$0xff]
    %v528 = vld [vmem:[#allocation2 + $0x5d0] sm:$0xff]
    %v529 = vld [vmem:[#allocation2 + $0x5d8] sm:$0xff]
    %v530 = vld [vmem:[#allocation2 + $0x5e0] sm:$0xff]
    %v531 = vld [vmem:[#allocation2 + $0x5e8] sm:$0xff]
    %v532 = vld [vmem:[#allocation2 + $0x5f0] sm:$0xff]
    %v533 = vld [vmem:[#allocation2 + $0x5f8] sm:$0xff]
    %v534 = vld [vmem:[#allocation2 + $0x600] sm:$0xff]
    %v535 = vld [vmem:[#allocation2 + $0x608] sm:$0xff]
    %v536 = vld [vmem:[#allocation2 + $0x610] sm:$0xff]
    %v537 = vld [vmem:[#allocation2 + $0x618] sm:$0xff]
    %v538 = vld [vmem:[#allocation2 + $0x620] sm:$0xff]
    %v539 = vld [vmem:[#allocation2 + $0x628] sm:$0xff]
    %v540 = vld [vmem:[#allocation2 + $0x630] sm:$0xff]
    %v541 = vld [vmem:[#allocation2 + $0x638] sm:$0xff]
    %v542 = vld [vmem:[#allocation2 + $0x640] sm:$0xff]
    %v543 = vld [vmem:[#allocation2 + $0x648] sm:$0xff]
    %v544 = vld [vmem:[#allocation2 + $0x650] sm:$0xff]
    %v545 = vld [vmem:[#allocation2 + $0x658] sm:$0xff]
    %v546 = vld [vmem:[#allocation2 + $0x660] sm:$0xff]
    %v547 = vld [vmem:[#allocation2 + $0x668] sm:$0xff]
    %v548 = vld [vmem:[#allocation2 + $0x670] sm:$0xff]
    %v549 = vld [vmem:[#allocation2 + $0x678] sm:$0xff]
    %v550 = vld [vmem:[#allocation2 + $0x680] sm:$0xff]
    %v551 = vld [vmem:[#allocation2 + $0x688] sm:$0xff]
    %v552 = vld [vmem:[#allocation2 + $0x690] sm:$0xff]
    %v553 = vld [vmem:[#allocation2 + $0x698] sm:$0xff]
    %v554 = vld [vmem:[#allocation2 + $0x6a0] sm:$0xff]
    %v555 = vld [vmem:[#allocation2 + $0x6a8] sm:$0xff]
    %v556 = vld [vmem:[#allocation2 + $0x6b0] sm:$0xff]
    %v557 = vld [vmem:[#allocation2 + $0x6b8] sm:$0xff]
    %v558 = vld [vmem:[#allocation2 + $0x6c0] sm:$0xff]
    %v559 = vld [vmem:[#allocation2 + $0x6c8] sm:$0xff]
    %v560 = vld [vmem:[#allocation2 + $0x6d0] sm:$0xff]
    %v561 = vld [vmem:[#allocation2 + $0x6d8] sm:$0xff]
    %v562 = vld [vmem:[#allocation2 + $0x6e0] sm:$0xff]
    %v563 = vld [vmem:[#allocation2 + $0x6e8] sm:$0xff]
    %v564 = vld [vmem:[#allocation2 + $0x6f0] sm:$0xff]
    %v565 = vld [vmem:[#allocation2 + $0x6f8] sm:$0xff]
    %v566 = vld [vmem:[#allocation2 + $0x700] sm:$0xff]
    %v567 = vld [vmem:[#allocation2 + $0x708] sm:$0xff]
    %v568 = vld [vmem:[#allocation2 + $0x710] sm:$0xff]
    %v569 = vld [vmem:[#allocation2 + $0x718] sm:$0xff]
    %v570 = vld [vmem:[#allocation2 + $0x720] sm:$0xff]
    %v571 = vld [vmem:[#allocation2 + $0x728] sm:$0xff]
    %v572 = vld [vmem:[#allocation2 + $0x730] sm:$0xff]
    %v573 = vld [vmem:[#allocation2 + $0x738] sm:$0xff]
    %v574 = vld [vmem:[#allocation2 + $0x740] sm:$0xff]
    %v575 = vld [vmem:[#allocation2 + $0x748] sm:$0xff]
    %v576 = vld [vmem:[#allocation2 + $0x750] sm:$0xff]
    %v577 = vld [vmem:[#allocation2 + $0x758] sm:$0xff]
    %v578 = vld [vmem:[#allocation2 + $0x760] sm:$0xff]
    %v579 = vld [vmem:[#allocation2 + $0x768] sm:$0xff]
    %v580 = vld [vmem:[#allocation2 + $0x770] sm:$0xff]
    %v581 = vld [vmem:[#allocation2 + $0x778] sm:$0xff]
    %v582 = vld [vmem:[#allocation2 + $0x780] sm:$0xff]
    %v583 = vld [vmem:[#allocation2 + $0x788] sm:$0xff]
    %v584 = vld [vmem:[#allocation2 + $0x790] sm:$0xff]
    %v585 = vld [vmem:[#allocation2 + $0x798] sm:$0xff]
    %v586 = vld [vmem:[#allocation2 + $0x7a0] sm:$0xff]
    %v587 = vld [vmem:[#allocation2 + $0x7a8] sm:$0xff]
    %v588 = vld [vmem:[#allocation2 + $0x7b0] sm:$0xff]
    %v589 = vld [vmem:[#allocation2 + $0x7b8] sm:$0xff]
    %v590 = vld [vmem:[#allocation2 + $0x7c0] sm:$0xff]
    %v591 = vld [vmem:[#allocation2 + $0x7c8] sm:$0xff]
    %v592 = vld [vmem:[#allocation2 + $0x7d0] sm:$0xff]
    %v593 = vld [vmem:[#allocation2 + $0x7d8] sm:$0xff]
    %v594 = vld [vmem:[#allocation2 + $0x7e0] sm:$0xff]
    %v595 = vld [vmem:[#allocation2 + $0x7e8] sm:$0xff]
    %v596 = vld [vmem:[#allocation2 + $0x7f0] sm:$0xff]
    %v597 = vld [vmem:[#allocation2 + $0x7f8] sm:$0xff]
    %v598 = vld [vmem:[#allocation2 + $0x800] sm:$0xff]
    %v599 = vld [vmem:[#allocation2 + $0x808] sm:$0xff]
    %v600 = vld [vmem:[#allocation2 + $0x810] sm:$0xff]
    %v601 = vld [vmem:[#allocation2 + $0x818] sm:$0xff]
    %v602 = vld [vmem:[#allocation2 + $0x820] sm:$0xff]
    %v603 = vld [vmem:[#allocation2 + $0x828] sm:$0xff]
    %v604 = vld [vmem:[#allocation2 + $0x830] sm:$0xff]
    %v605 = vld [vmem:[#allocation2 + $0x838] sm:$0xff]
    %v606 = vld [vmem:[#allocation2 + $0x840] sm:$0xff]
    %v607 = vld [vmem:[#allocation2 + $0x848] sm:$0xff]
    %v608 = vld [vmem:[#allocation2 + $0x850] sm:$0xff]
    %v609 = vld [vmem:[#allocation2 + $0x858] sm:$0xff]
    %v610 = vld [vmem:[#allocation2 + $0x860] sm:$0xff]
    %v611 = vld [vmem:[#allocation2 + $0x868] sm:$0xff]
    %v612 = vld [vmem:[#allocation2 + $0x870] sm:$0xff]
    %v613 = vld [vmem:[#allocation2 + $0x878] sm:$0xff]
    %v614 = vld [vmem:[#allocation2 + $0x880] sm:$0xff]
    %v615 = vld [vmem:[#allocation2 + $0x888] sm:$0xff]
    %v616 = vld [vmem:[#allocation2 + $0x890] sm:$0xff]
    %v617 = vld [vmem:[#allocation2 + $0x898] sm:$0xff]
    %v618 = vld [vmem:[#allocation2 + $0x8a0] sm:$0xff]
    %v619 = vld [vmem:[#allocation2 + $0x8a8] sm:$0xff]
    %v620 = vld [vmem:[#allocation2 + $0x8b0] sm:$0xff]
    %v621 = vld [vmem:[#allocation2 + $0x8b8] sm:$0xff]
    %v622 = vld [vmem:[#allocation2 + $0x8c0] sm:$0xff]
    %v623 = vld [vmem:[#allocation2 + $0x8c8] sm:$0xff]
    %v624 = vld [vmem:[#allocation2 + $0x8d0] sm:$0xff]
    %v625 = vld [vmem:[#allocation2 + $0x8d8] sm:$0xff]
    %v626 = vld [vmem:[#allocation2 + $0x8e0] sm:$0xff]
    %v627 = vld [vmem:[#allocation2 + $0x8e8] sm:$0xff]
    %v628 = vld [vmem:[#allocation2 + $0x8f0] sm:$0xff]
    %v629 = vld [vmem:[#allocation2 + $0x8f8] sm:$0xff]
    %v630 = vld [vmem:[#allocation2 + $0x900] sm:$0xff]
    %v631 = vld [vmem:[#allocation2 + $0x908] sm:$0xff]
    %v632 = vld [vmem:[#allocation2 + $0x910] sm:$0xff]
    %v633 = vld [vmem:[#allocation2 + $0x918] sm:$0xff]
    %v634 = vld [vmem:[#allocation2 + $0x920] sm:$0xff]
    %v635 = vld [vmem:[#allocation2 + $0x928] sm:$0xff]
    %v636 = vld [vmem:[#allocation2 + $0x930] sm:$0xff]
    %v637 = vld [vmem:[#allocation2 + $0x938] sm:$0xff]
    %v638 = vld [vmem:[#allocation2 + $0x940] sm:$0xff]
    %v639 = vld [vmem:[#allocation2 + $0x948] sm:$0xff]
    %v640 = vld [vmem:[#allocation2 + $0x950] sm:$0xff]
    %v641 = vld [vmem:[#allocation2 + $0x958] sm:$0xff]
    %v642 = vld [vmem:[#allocation2 + $0x960] sm:$0xff]
    %v643 = vld [vmem:[#allocation2 + $0x968] sm:$0xff]
    %v644 = vld [vmem:[#allocation2 + $0x970] sm:$0xff]
    %v645 = vld [vmem:[#allocation2 + $0x978] sm:$0xff]
    %v646 = vld [vmem:[#allocation2 + $0x980] sm:$0xff]
    %v647 = vld [vmem:[#allocation2 + $0x988] sm:$0xff]
    %v648 = vld [vmem:[#allocation2 + $0x990] sm:$0xff]
    %v649 = vld [vmem:[#allocation2 + $0x998] sm:$0xff]
    %v650 = vld [vmem:[#allocation2 + $0x9a0] sm:$0xff]
    %v651 = vld [vmem:[#allocation2 + $0x9a8] sm:$0xff]
    %v652 = vld [vmem:[#allocation2 + $0x9b0] sm:$0xff]
    %v653 = vld [vmem:[#allocation2 + $0x9b8] sm:$0xff]
    %v654 = vld [vmem:[#allocation2 + $0x9c0] sm:$0xff]
    %v655 = vld [vmem:[#allocation2 + $0x9c8] sm:$0xff]
    %v656 = vld [vmem:[#allocation2 + $0x9d0] sm:$0xff]
    %v657 = vld [vmem:[#allocation2 + $0x9d8] sm:$0xff]
    %v658 = vld [vmem:[#allocation2 + $0x9e0] sm:$0xff]
    %v659 = vld [vmem:[#allocation2 + $0x9e8] sm:$0xff]
    %v660 = vld [vmem:[#allocation2 + $0x9f0] sm:$0xff]
    %v661 = vld [vmem:[#allocation2 + $0x9f8] sm:$0xff]
    %v662 = vld [vmem:[#allocation2 + $0xa00] sm:$0xff]
    %v663 = vld [vmem:[#allocation2 + $0xa08] sm:$0xff]
    %v664 = vld [vmem:[#allocation2 + $0xa10] sm:$0xff]
    %v665 = vld [vmem:[#allocation2 + $0xa18] sm:$0xff]
    %v666 = vld [vmem:[#allocation2 + $0xa20] sm:$0xff]
    %v667 = vld [vmem:[#allocation2 + $0xa28] sm:$0xff]
    %v668 = vld [vmem:[#allocation2 + $0xa30] sm:$0xff]
    %v669 = vld [vmem:[#allocation2 + $0xa38] sm:$0xff]
    %v670 = vld [vmem:[#allocation2 + $0xa40] sm:$0xff]
    %v671 = vld [vmem:[#allocation2 + $0xa48] sm:$0xff]
    %v672 = vld [vmem:[#allocation2 + $0xa50] sm:$0xff]
    %v673 = vld [vmem:[#allocation2 + $0xa58] sm:$0xff]
    %v674 = vld [vmem:[#allocation2 + $0xa60] sm:$0xff]
    %v675 = vld [vmem:[#allocation2 + $0xa68] sm:$0xff]
    %v676 = vld [vmem:[#allocation2 + $0xa70] sm:$0xff]
    %v677 = vld [vmem:[#allocation2 + $0xa78] sm:$0xff]
    %v678 = vld [vmem:[#allocation2 + $0xa80] sm:$0xff]
    %v679 = vld [vmem:[#allocation2 + $0xa88] sm:$0xff]
    %v680 = vld [vmem:[#allocation2 + $0xa90] sm:$0xff]
    %v681 = vld [vmem:[#allocation2 + $0xa98] sm:$0xff]
    %v682 = vld [vmem:[#allocation2 + $0xaa0] sm:$0xff]
    %v683 = vld [vmem:[#allocation2 + $0xaa8] sm:$0xff]
    %v684 = vld [vmem:[#allocation2 + $0xab0] sm:$0xff]
    %v685 = vld [vmem:[#allocation2 + $0xab8] sm:$0xff]
    %v686 = vld [vmem:[#allocation2 + $0xac0] sm:$0xff]
    %v687 = vld [vmem:[#allocation2 + $0xac8] sm:$0xff]
    %v688 = vld [vmem:[#allocation2 + $0xad0] sm:$0xff]
    %v689 = vld [vmem:[#allocation2 + $0xad8] sm:$0xff]
    %v690 = vld [vmem:[#allocation2 + $0xae0] sm:$0xff]
    %v691 = vld [vmem:[#allocation2 + $0xae8] sm:$0xff]
    %v692 = vld [vmem:[#allocation2 + $0xaf0] sm:$0xff]
    %v693 = vld [vmem:[#allocation2 + $0xaf8] sm:$0xff]
    %v694 = vld [vmem:[#allocation2 + $0xb00] sm:$0xff]
    %v695 = vld [vmem:[#allocation2 + $0xb08] sm:$0xff]
    %v696 = vld [vmem:[#allocation2 + $0xb10] sm:$0xff]
    %v697 = vld [vmem:[#allocation2 + $0xb18] sm:$0xff]
    %v698 = vld [vmem:[#allocation2 + $0xb20] sm:$0xff]
    %v699 = vld [vmem:[#allocation2 + $0xb28] sm:$0xff]
    %v700 = vld [vmem:[#allocation2 + $0xb30] sm:$0xff]
    %v701 = vld [vmem:[#allocation2 + $0xb38] sm:$0xff]
    %v702 = vld [vmem:[#allocation2 + $0xb40] sm:$0xff]
    %v703 = vld [vmem:[#allocation2 + $0xb48] sm:$0xff]
    %v704 = vld [vmem:[#allocation2 + $0xb50] sm:$0xff]
    %v705 = vld [vmem:[#allocation2 + $0xb58] sm:$0xff]
    %v706 = vld [vmem:[#allocation2 + $0xb60] sm:$0xff]
    %v707 = vld [vmem:[#allocation2 + $0xb68] sm:$0xff]
    %v708 = vld [vmem:[#allocation2 + $0xb70] sm:$0xff]
    %v709 = vld [vmem:[#allocation2 + $0xb78] sm:$0xff]
    %v710 = vld [vmem:[#allocation2 + $0xb80] sm:$0xff]
    %v711 = vld [vmem:[#allocation2 + $0xb88] sm:$0xff]
    %v712 = vld [vmem:[#allocation2 + $0xb90] sm:$0xff]
    %v713 = vld [vmem:[#allocation2 + $0xb98] sm:$0xff]
    %v714 = vld [vmem:[#allocation2 + $0xba0] sm:$0xff]
    %v715 = vld [vmem:[#allocation2 + $0xba8] sm:$0xff]
    %v716 = vld [vmem:[#allocation2 + $0xbb0] sm:$0xff]
    %v717 = vld [vmem:[#allocation2 + $0xbb8] sm:$0xff]
    %v718 = vld [vmem:[#allocation2 + $0xbc0] sm:$0xff]
    %v719 = vld [vmem:[#allocation2 + $0xbc8] sm:$0xff]
    %v720 = vld [vmem:[#allocation2 + $0xbd0] sm:$0xff]
    %v721 = vld [vmem:[#allocation2 + $0xbd8] sm:$0xff]
    %v722 = vld [vmem:[#allocation2 + $0xbe0] sm:$0xff]
    %v723 = vld [vmem:[#allocation2 + $0xbe8] sm:$0xff]
    %v724 = vld [vmem:[#allocation2 + $0xbf0] sm:$0xff]
    %v725 = vld [vmem:[#allocation2 + $0xbf8] sm:$0xff]
    %v1110 = vunpack.c.l.b16 %v342
    %v1111 = vunpack.c.h.b16 %v342
    %v1112 = vunpack.c.l.b16 %v343
    %v1113 = vunpack.c.h.b16 %v343
    %v1114 = vunpack.c.l.b16 %v344
    %v1115 = vunpack.c.h.b16 %v344
    %v1116 = vunpack.c.l.b16 %v345
    %v1117 = vunpack.c.h.b16 %v345
    %v1118 = vunpack.c.l.b16 %v346
    %v1119 = vunpack.c.h.b16 %v346
    %v1120 = vunpack.c.l.b16 %v347
    %v1121 = vunpack.c.h.b16 %v347
    %v1122 = vunpack.c.l.b16 %v348
    %v1123 = vunpack.c.h.b16 %v348
    %v1124 = vunpack.c.l.b16 %v349
    %v1125 = vunpack.c.h.b16 %v349
    %v1126 = vunpack.c.l.b16 %v350
    %v1127 = vunpack.c.h.b16 %v350
    %v1128 = vunpack.c.l.b16 %v351
    %v1129 = vunpack.c.h.b16 %v351
    %v1130 = vunpack.c.l.b16 %v352
    %v1131 = vunpack.c.h.b16 %v352
    %v1132 = vunpack.c.l.b16 %v353
    %v1133 = vunpack.c.h.b16 %v353
    %v1134 = vunpack.c.l.b16 %v354
    %v1135 = vunpack.c.h.b16 %v354
    %v1136 = vunpack.c.l.b16 %v355
    %v1137 = vunpack.c.h.b16 %v355
    %v1138 = vunpack.c.l.b16 %v356
    %v1139 = vunpack.c.h.b16 %v356
    %v1140 = vunpack.c.l.b16 %v357
    %v1141 = vunpack.c.h.b16 %v357
    %v1142 = vunpack.c.l.b16 %v358
    %v1143 = vunpack.c.h.b16 %v358
    %v1144 = vunpack.c.l.b16 %v359
    %v1145 = vunpack.c.h.b16 %v359
    %v1146 = vunpack.c.l.b16 %v360
    %v1147 = vunpack.c.h.b16 %v360
    %v1148 = vunpack.c.l.b16 %v361
    %v1149 = vunpack.c.h.b16 %v361
    %v1150 = vunpack.c.l.b16 %v362
    %v1151 = vunpack.c.h.b16 %v362
    %v1152 = vunpack.c.l.b16 %v363
    %v1153 = vunpack.c.h.b16 %v363
    %v1154 = vunpack.c.l.b16 %v364
    %v1155 = vunpack.c.h.b16 %v364
    %v1156 = vunpack.c.l.b16 %v365
    %v1157 = vunpack.c.h.b16 %v365
    %v1158 = vunpack.c.l.b16 %v366
    %v1159 = vunpack.c.h.b16 %v366
    %v1160 = vunpack.c.l.b16 %v367
    %v1161 = vunpack.c.h.b16 %v367
    %v1162 = vunpack.c.l.b16 %v368
    %v1163 = vunpack.c.h.b16 %v368
    %v1164 = vunpack.c.l.b16 %v369
    %v1165 = vunpack.c.h.b16 %v369
    %v1166 = vunpack.c.l.b16 %v370
    %v1167 = vunpack.c.h.b16 %v370
    %v1168 = vunpack.c.l.b16 %v371
    %v1169 = vunpack.c.h.b16 %v371
    %v1170 = vunpack.c.l.b16 %v372
    %v1171 = vunpack.c.h.b16 %v372
    %v1172 = vunpack.c.l.b16 %v373
    %v1173 = vunpack.c.h.b16 %v373
    %v1174 = vunpack.c.l.b16 %v374
    %v1175 = vunpack.c.h.b16 %v374
    %v1176 = vunpack.c.l.b16 %v375
    %v1177 = vunpack.c.h.b16 %v375
    %v1178 = vunpack.c.l.b16 %v376
    %v1179 = vunpack.c.h.b16 %v376
    %v1180 = vunpack.c.l.b16 %v377
    %v1181 = vunpack.c.h.b16 %v377
    %v1182 = vunpack.c.l.b16 %v378
    %v1183 = vunpack.c.h.b16 %v378
    %v1184 = vunpack.c.l.b16 %v379
    %v1185 = vunpack.c.h.b16 %v379
    %v1186 = vunpack.c.l.b16 %v380
    %v1187 = vunpack.c.h.b16 %v380
    %v1188 = vunpack.c.l.b16 %v381
    %v1189 = vunpack.c.h.b16 %v381
    %v1190 = vunpack.c.l.b16 %v382
    %v1191 = vunpack.c.h.b16 %v382
    %v1192 = vunpack.c.l.b16 %v383
    %v1193 = vunpack.c.h.b16 %v383
    %v1194 = vunpack.c.l.b16 %v384
    %v1195 = vunpack.c.h.b16 %v384
    %v1196 = vunpack.c.l.b16 %v385
    %v1197 = vunpack.c.h.b16 %v385
    %v1198 = vunpack.c.l.b16 %v386
    %v1199 = vunpack.c.h.b16 %v386
    %v1200 = vunpack.c.l.b16 %v387
    %v1201 = vunpack.c.h.b16 %v387
    %v1202 = vunpack.c.l.b16 %v388
    %v1203 = vunpack.c.h.b16 %v388
    %v1204 = vunpack.c.l.b16 %v389
    %v1205 = vunpack.c.h.b16 %v389
    %v1206 = vunpack.c.l.b16 %v390
    %v1207 = vunpack.c.h.b16 %v390
    %v1208 = vunpack.c.l.b16 %v391
    %v1209 = vunpack.c.h.b16 %v391
    %v1210 = vunpack.c.l.b16 %v392
    %v1211 = vunpack.c.h.b16 %v392
    %v1212 = vunpack.c.l.b16 %v393
    %v1213 = vunpack.c.h.b16 %v393
    %v1214 = vunpack.c.l.b16 %v394
    %v1215 = vunpack.c.h.b16 %v394
    %v1216 = vunpack.c.l.b16 %v395
    %v1217 = vunpack.c.h.b16 %v395
    %v1218 = vunpack.c.l.b16 %v396
    %v1219 = vunpack.c.h.b16 %v396
    %v1220 = vunpack.c.l.b16 %v397
    %v1221 = vunpack.c.h.b16 %v397
    %v1222 = vunpack.c.l.b16 %v398
    %v1223 = vunpack.c.h.b16 %v398
    %v1224 = vunpack.c.l.b16 %v399
    %v1225 = vunpack.c.h.b16 %v399
    %v1226 = vunpack.c.l.b16 %v400
    %v1227 = vunpack.c.h.b16 %v400
    %v1228 = vunpack.c.l.b16 %v401
    %v1229 = vunpack.c.h.b16 %v401
    %v1230 = vunpack.c.l.b16 %v402
    %v1231 = vunpack.c.h.b16 %v402
    %v1232 = vunpack.c.l.b16 %v403
    %v1233 = vunpack.c.h.b16 %v403
    %v1234 = vunpack.c.l.b16 %v404
    %v1235 = vunpack.c.h.b16 %v404
    %v1236 = vunpack.c.l.b16 %v405
    %v1237 = vunpack.c.h.b16 %v405
    %v1238 = vunpack.c.l.b16 %v406
    %v1239 = vunpack.c.h.b16 %v406
    %v1240 = vunpack.c.l.b16 %v407
    %v1241 = vunpack.c.h.b16 %v407
    %v1242 = vunpack.c.l.b16 %v408
    %v1243 = vunpack.c.h.b16 %v408
    %v1244 = vunpack.c.l.b16 %v409
    %v1245 = vunpack.c.h.b16 %v409
    %v1246 = vunpack.c.l.b16 %v410
    %v1247 = vunpack.c.h.b16 %v410
    %v1248 = vunpack.c.l.b16 %v411
    %v1249 = vunpack.c.h.b16 %v411
    %v1250 = vunpack.c.l.b16 %v412
    %v1251 = vunpack.c.h.b16 %v412
    %v1252 = vunpack.c.l.b16 %v413
    %v1253 = vunpack.c.h.b16 %v413
    %v1254 = vunpack.c.l.b16 %v414
    %v1255 = vunpack.c.h.b16 %v414
    %v1256 = vunpack.c.l.b16 %v415
    %v1257 = vunpack.c.h.b16 %v415
    %v1258 = vunpack.c.l.b16 %v416
    %v1259 = vunpack.c.h.b16 %v416
    %v1260 = vunpack.c.l.b16 %v417
    %v1261 = vunpack.c.h.b16 %v417
    %v1262 = vunpack.c.l.b16 %v418
    %v1263 = vunpack.c.h.b16 %v418
    %v1264 = vunpack.c.l.b16 %v419
    %v1265 = vunpack.c.h.b16 %v419
    %v1266 = vunpack.c.l.b16 %v420
    %v1267 = vunpack.c.h.b16 %v420
    %v1268 = vunpack.c.l.b16 %v421
    %v1269 = vunpack.c.h.b16 %v421
    %v1270 = vunpack.c.l.b16 %v422
    %v1271 = vunpack.c.h.b16 %v422
    %v1272 = vunpack.c.l.b16 %v423
    %v1273 = vunpack.c.h.b16 %v423
    %v1274 = vunpack.c.l.b16 %v424
    %v1275 = vunpack.c.h.b16 %v424
    %v1276 = vunpack.c.l.b16 %v425
    %v1277 = vunpack.c.h.b16 %v425
    %v1278 = vunpack.c.l.b16 %v426
    %v1279 = vunpack.c.h.b16 %v426
    %v1280 = vunpack.c.l.b16 %v427
    %v1281 = vunpack.c.h.b16 %v427
    %v1282 = vunpack.c.l.b16 %v428
    %v1283 = vunpack.c.h.b16 %v428
    %v1284 = vunpack.c.l.b16 %v429
    %v1285 = vunpack.c.h.b16 %v429
    %v1286 = vunpack.c.l.b16 %v430
    %v1287 = vunpack.c.h.b16 %v430
    %v1288 = vunpack.c.l.b16 %v431
    %v1289 = vunpack.c.h.b16 %v431
    %v1290 = vunpack.c.l.b16 %v432
    %v1291 = vunpack.c.h.b16 %v432
    %v1292 = vunpack.c.l.b16 %v433
    %v1293 = vunpack.c.h.b16 %v433
    %v1294 = vunpack.c.l.b16 %v434
    %v1295 = vunpack.c.h.b16 %v434
    %v1296 = vunpack.c.l.b16 %v435
    %v1297 = vunpack.c.h.b16 %v435
    %v1298 = vunpack.c.l.b16 %v436
    %v1299 = vunpack.c.h.b16 %v436
    %v1300 = vunpack.c.l.b16 %v437
    %v1301 = vunpack.c.h.b16 %v437
    %v1302 = vunpack.c.l.b16 %v438
    %v1303 = vunpack.c.h.b16 %v438
    %v1304 = vunpack.c.l.b16 %v439
    %v1305 = vunpack.c.h.b16 %v439
    %v1306 = vunpack.c.l.b16 %v440
    %v1307 = vunpack.c.h.b16 %v440
    %v1308 = vunpack.c.l.b16 %v441
    %v1309 = vunpack.c.h.b16 %v441
    %v1310 = vunpack.c.l.b16 %v442
    %v1311 = vunpack.c.h.b16 %v442
    %v1312 = vunpack.c.l.b16 %v443
    %v1313 = vunpack.c.h.b16 %v443
    %v1314 = vunpack.c.l.b16 %v444
    %v1315 = vunpack.c.h.b16 %v444
    %v1316 = vunpack.c.l.b16 %v445
    %v1317 = vunpack.c.h.b16 %v445
    %v1318 = vunpack.c.l.b16 %v446
    %v1319 = vunpack.c.h.b16 %v446
    %v1320 = vunpack.c.l.b16 %v447
    %v1321 = vunpack.c.h.b16 %v447
    %v1322 = vunpack.c.l.b16 %v448
    %v1323 = vunpack.c.h.b16 %v448
    %v1324 = vunpack.c.l.b16 %v449
    %v1325 = vunpack.c.h.b16 %v449
    %v1326 = vunpack.c.l.b16 %v450
    %v1327 = vunpack.c.h.b16 %v450
    %v1328 = vunpack.c.l.b16 %v451
    %v1329 = vunpack.c.h.b16 %v451
    %v1330 = vunpack.c.l.b16 %v452
    %v1331 = vunpack.c.h.b16 %v452
    %v1332 = vunpack.c.l.b16 %v453
    %v1333 = vunpack.c.h.b16 %v453
    %v1334 = vunpack.c.l.b16 %v454
    %v1335 = vunpack.c.h.b16 %v454
    %v1336 = vunpack.c.l.b16 %v455
    %v1337 = vunpack.c.h.b16 %v455
    %v1338 = vunpack.c.l.b16 %v456
    %v1339 = vunpack.c.h.b16 %v456
    %v1340 = vunpack.c.l.b16 %v457
    %v1341 = vunpack.c.h.b16 %v457
    %v1342 = vunpack.c.l.b16 %v458
    %v1343 = vunpack.c.h.b16 %v458
    %v1344 = vunpack.c.l.b16 %v459
    %v1345 = vunpack.c.h.b16 %v459
    %v1346 = vunpack.c.l.b16 %v460
    %v1347 = vunpack.c.h.b16 %v460
    %v1348 = vunpack.c.l.b16 %v461
    %v1349 = vunpack.c.h.b16 %v461
    %v1350 = vunpack.c.l.b16 %v462
    %v1351 = vunpack.c.h.b16 %v462
    %v1352 = vunpack.c.l.b16 %v463
    %v1353 = vunpack.c.h.b16 %v463
    %v1354 = vunpack.c.l.b16 %v464
    %v1355 = vunpack.c.h.b16 %v464
    %v1356 = vunpack.c.l.b16 %v465
    %v1357 = vunpack.c.h.b16 %v465
    %v1358 = vunpack.c.l.b16 %v466
    %v1359 = vunpack.c.h.b16 %v466
    %v1360 = vunpack.c.l.b16 %v467
    %v1361 = vunpack.c.h.b16 %v467
    %v1362 = vunpack.c.l.b16 %v468
    %v1363 = vunpack.c.h.b16 %v468
    %v1364 = vunpack.c.l.b16 %v469
    %v1365 = vunpack.c.h.b16 %v469
    %v1366 = vunpack.c.l.b16 %v470
    %v1367 = vunpack.c.h.b16 %v470
    %v1368 = vunpack.c.l.b16 %v471
    %v1369 = vunpack.c.h.b16 %v471
    %v1370 = vunpack.c.l.b16 %v472
    %v1371 = vunpack.c.h.b16 %v472
    %v1372 = vunpack.c.l.b16 %v473
    %v1373 = vunpack.c.h.b16 %v473
    %v1374 = vunpack.c.l.b16 %v474
    %v1375 = vunpack.c.h.b16 %v474
    %v1376 = vunpack.c.l.b16 %v475
    %v1377 = vunpack.c.h.b16 %v475
    %v1378 = vunpack.c.l.b16 %v476
    %v1379 = vunpack.c.h.b16 %v476
    %v1380 = vunpack.c.l.b16 %v477
    %v1381 = vunpack.c.h.b16 %v477
    %v1382 = vunpack.c.l.b16 %v478
    %v1383 = vunpack.c.h.b16 %v478
    %v1384 = vunpack.c.l.b16 %v479
    %v1385 = vunpack.c.h.b16 %v479
    %v1386 = vunpack.c.l.b16 %v480
    %v1387 = vunpack.c.h.b16 %v480
    %v1388 = vunpack.c.l.b16 %v481
    %v1389 = vunpack.c.h.b16 %v481
    %v1390 = vunpack.c.l.b16 %v482
    %v1391 = vunpack.c.h.b16 %v482
    %v1392 = vunpack.c.l.b16 %v483
    %v1393 = vunpack.c.h.b16 %v483
    %v1394 = vunpack.c.l.b16 %v484
    %v1395 = vunpack.c.h.b16 %v484
    %v1396 = vunpack.c.l.b16 %v485
    %v1397 = vunpack.c.h.b16 %v485
    %v1398 = vunpack.c.l.b16 %v486
    %v1399 = vunpack.c.h.b16 %v486
    %v1400 = vunpack.c.l.b16 %v487
    %v1401 = vunpack.c.h.b16 %v487
    %v1402 = vunpack.c.l.b16 %v488
    %v1403 = vunpack.c.h.b16 %v488
    %v1404 = vunpack.c.l.b16 %v489
    %v1405 = vunpack.c.h.b16 %v489
    %v1406 = vunpack.c.l.b16 %v490
    %v1407 = vunpack.c.h.b16 %v490
    %v1408 = vunpack.c.l.b16 %v491
    %v1409 = vunpack.c.h.b16 %v491
    %v1410 = vunpack.c.l.b16 %v492
    %v1411 = vunpack.c.h.b16 %v492
    %v1412 = vunpack.c.l.b16 %v493
    %v1413 = vunpack.c.h.b16 %v493
    %v1414 = vunpack.c.l.b16 %v494
    %v1415 = vunpack.c.h.b16 %v494
    %v1416 = vunpack.c.l.b16 %v495
    %v1417 = vunpack.c.h.b16 %v495
    %v1418 = vunpack.c.l.b16 %v496
    %v1419 = vunpack.c.h.b16 %v496
    %v1420 = vunpack.c.l.b16 %v497
    %v1421 = vunpack.c.h.b16 %v497
    %v1422 = vunpack.c.l.b16 %v498
    %v1423 = vunpack.c.h.b16 %v498
    %v1424 = vunpack.c.l.b16 %v499
    %v1425 = vunpack.c.h.b16 %v499
    %v1426 = vunpack.c.l.b16 %v500
    %v1427 = vunpack.c.h.b16 %v500
    %v1428 = vunpack.c.l.b16 %v501
    %v1429 = vunpack.c.h.b16 %v501
    %v1430 = vunpack.c.l.b16 %v502
    %v1431 = vunpack.c.h.b16 %v502
    %v1432 = vunpack.c.l.b16 %v503
    %v1433 = vunpack.c.h.b16 %v503
    %v1434 = vunpack.c.l.b16 %v504
    %v1435 = vunpack.c.h.b16 %v504
    %v1436 = vunpack.c.l.b16 %v505
    %v1437 = vunpack.c.h.b16 %v505
    %v1438 = vunpack.c.l.b16 %v506
    %v1439 = vunpack.c.h.b16 %v506
    %v1440 = vunpack.c.l.b16 %v507
    %v1441 = vunpack.c.h.b16 %v507
    %v1442 = vunpack.c.l.b16 %v508
    %v1443 = vunpack.c.h.b16 %v508
    %v1444 = vunpack.c.l.b16 %v509
    %v1445 = vunpack.c.h.b16 %v509
    %v1446 = vunpack.c.l.b16 %v510
    %v1447 = vunpack.c.h.b16 %v510
    %v1448 = vunpack.c.l.b16 %v511
    %v1449 = vunpack.c.h.b16 %v511
    %v1450 = vunpack.c.l.b16 %v512
    %v1451 = vunpack.c.h.b16 %v512
    %v1452 = vunpack.c.l.b16 %v513
    %v1453 = vunpack.c.h.b16 %v513
    %v1454 = vunpack.c.l.b16 %v514
    %v1455 = vunpack.c.h.b16 %v514
    %v1456 = vunpack.c.l.b16 %v515
    %v1457 = vunpack.c.h.b16 %v515
    %v1458 = vunpack.c.l.b16 %v516
    %v1459 = vunpack.c.h.b16 %v516
    %v1460 = vunpack.c.l.b16 %v517
    %v1461 = vunpack.c.h.b16 %v517
    %v1462 = vunpack.c.l.b16 %v518
    %v1463 = vunpack.c.h.b16 %v518
    %v1464 = vunpack.c.l.b16 %v519
    %v1465 = vunpack.c.h.b16 %v519
    %v1466 = vunpack.c.l.b16 %v520
    %v1467 = vunpack.c.h.b16 %v520
    %v1468 = vunpack.c.l.b16 %v521
    %v1469 = vunpack.c.h.b16 %v521
    %v1470 = vunpack.c.l.b16 %v522
    %v1471 = vunpack.c.h.b16 %v522
    %v1472 = vunpack.c.l.b16 %v523
    %v1473 = vunpack.c.h.b16 %v523
    %v1474 = vunpack.c.l.b16 %v524
    %v1475 = vunpack.c.h.b16 %v524
    %v1476 = vunpack.c.l.b16 %v525
    %v1477 = vunpack.c.h.b16 %v525
    %v1478 = vunpack.c.l.b16 %v526
    %v1479 = vunpack.c.h.b16 %v526
    %v1480 = vunpack.c.l.b16 %v527
    %v1481 = vunpack.c.h.b16 %v527
    %v1482 = vunpack.c.l.b16 %v528
    %v1483 = vunpack.c.h.b16 %v528
    %v1484 = vunpack.c.l.b16 %v529
    %v1485 = vunpack.c.h.b16 %v529
    %v1486 = vunpack.c.l.b16 %v530
    %v1487 = vunpack.c.h.b16 %v530
    %v1488 = vunpack.c.l.b16 %v531
    %v1489 = vunpack.c.h.b16 %v531
    %v1490 = vunpack.c.l.b16 %v532
    %v1491 = vunpack.c.h.b16 %v532
    %v1492 = vunpack.c.l.b16 %v533
    %v1493 = vunpack.c.h.b16 %v533
    %v1494 = vunpack.c.l.b16 %v534
    %v1495 = vunpack.c.h.b16 %v534
    %v1496 = vunpack.c.l.b16 %v535
    %v1497 = vunpack.c.h.b16 %v535
    %v1498 = vunpack.c.l.b16 %v536
    %v1499 = vunpack.c.h.b16 %v536
    %v1500 = vunpack.c.l.b16 %v537
    %v1501 = vunpack.c.h.b16 %v537
    %v1502 = vunpack.c.l.b16 %v538
    %v1503 = vunpack.c.h.b16 %v538
    %v1504 = vunpack.c.l.b16 %v539
    %v1505 = vunpack.c.h.b16 %v539
    %v1506 = vunpack.c.l.b16 %v540
    %v1507 = vunpack.c.h.b16 %v540
    %v1508 = vunpack.c.l.b16 %v541
    %v1509 = vunpack.c.h.b16 %v541
    %v1510 = vunpack.c.l.b16 %v542
    %v1511 = vunpack.c.h.b16 %v542
    %v1512 = vunpack.c.l.b16 %v543
    %v1513 = vunpack.c.h.b16 %v543
    %v1514 = vunpack.c.l.b16 %v544
    %v1515 = vunpack.c.h.b16 %v544
    %v1516 = vunpack.c.l.b16 %v545
    %v1517 = vunpack.c.h.b16 %v545
    %v1518 = vunpack.c.l.b16 %v546
    %v1519 = vunpack.c.h.b16 %v546
    %v1520 = vunpack.c.l.b16 %v547
    %v1521 = vunpack.c.h.b16 %v547
    %v1522 = vunpack.c.l.b16 %v548
    %v1523 = vunpack.c.h.b16 %v548
    %v1524 = vunpack.c.l.b16 %v549
    %v1525 = vunpack.c.h.b16 %v549
    %v1526 = vunpack.c.l.b16 %v550
    %v1527 = vunpack.c.h.b16 %v550
    %v1528 = vunpack.c.l.b16 %v551
    %v1529 = vunpack.c.h.b16 %v551
    %v1530 = vunpack.c.l.b16 %v552
    %v1531 = vunpack.c.h.b16 %v552
    %v1532 = vunpack.c.l.b16 %v553
    %v1533 = vunpack.c.h.b16 %v553
    %v1534 = vunpack.c.l.b16 %v554
    %v1535 = vunpack.c.h.b16 %v554
    %v1536 = vunpack.c.l.b16 %v555
    %v1537 = vunpack.c.h.b16 %v555
    %v1538 = vunpack.c.l.b16 %v556
    %v1539 = vunpack.c.h.b16 %v556
    %v1540 = vunpack.c.l.b16 %v557
    %v1541 = vunpack.c.h.b16 %v557
    %v1542 = vunpack.c.l.b16 %v558
    %v1543 = vunpack.c.h.b16 %v558
    %v1544 = vunpack.c.l.b16 %v559
    %v1545 = vunpack.c.h.b16 %v559
    %v1546 = vunpack.c.l.b16 %v560
    %v1547 = vunpack.c.h.b16 %v560
    %v1548 = vunpack.c.l.b16 %v561
    %v1549 = vunpack.c.h.b16 %v561
    %v1550 = vunpack.c.l.b16 %v562
    %v1551 = vunpack.c.h.b16 %v562
    %v1552 = vunpack.c.l.b16 %v563
    %v1553 = vunpack.c.h.b16 %v563
    %v1554 = vunpack.c.l.b16 %v564
    %v1555 = vunpack.c.h.b16 %v564
    %v1556 = vunpack.c.l.b16 %v565
    %v1557 = vunpack.c.h.b16 %v565
    %v1558 = vunpack.c.l.b16 %v566
    %v1559 = vunpack.c.h.b16 %v566
    %v1560 = vunpack.c.l.b16 %v567
    %v1561 = vunpack.c.h.b16 %v567
    %v1562 = vunpack.c.l.b16 %v568
    %v1563 = vunpack.c.h.b16 %v568
    %v1564 = vunpack.c.l.b16 %v569
    %v1565 = vunpack.c.h.b16 %v569
    %v1566 = vunpack.c.l.b16 %v570
    %v1567 = vunpack.c.h.b16 %v570
    %v1568 = vunpack.c.l.b16 %v571
    %v1569 = vunpack.c.h.b16 %v571
    %v1570 = vunpack.c.l.b16 %v572
    %v1571 = vunpack.c.h.b16 %v572
    %v1572 = vunpack.c.l.b16 %v573
    %v1573 = vunpack.c.h.b16 %v573
    %v1574 = vunpack.c.l.b16 %v574
    %v1575 = vunpack.c.h.b16 %v574
    %v1576 = vunpack.c.l.b16 %v575
    %v1577 = vunpack.c.h.b16 %v575
    %v1578 = vunpack.c.l.b16 %v576
    %v1579 = vunpack.c.h.b16 %v576
    %v1580 = vunpack.c.l.b16 %v577
    %v1581 = vunpack.c.h.b16 %v577
    %v1582 = vunpack.c.l.b16 %v578
    %v1583 = vunpack.c.h.b16 %v578
    %v1584 = vunpack.c.l.b16 %v579
    %v1585 = vunpack.c.h.b16 %v579
    %v1586 = vunpack.c.l.b16 %v580
    %v1587 = vunpack.c.h.b16 %v580
    %v1588 = vunpack.c.l.b16 %v581
    %v1589 = vunpack.c.h.b16 %v581
    %v1590 = vunpack.c.l.b16 %v582
    %v1591 = vunpack.c.h.b16 %v582
    %v1592 = vunpack.c.l.b16 %v583
    %v1593 = vunpack.c.h.b16 %v583
    %v1594 = vunpack.c.l.b16 %v584
    %v1595 = vunpack.c.h.b16 %v584
    %v1596 = vunpack.c.l.b16 %v585
    %v1597 = vunpack.c.h.b16 %v585
    %v1598 = vunpack.c.l.b16 %v586
    %v1599 = vunpack.c.h.b16 %v586
    %v1600 = vunpack.c.l.b16 %v587
    %v1601 = vunpack.c.h.b16 %v587
    %v1602 = vunpack.c.l.b16 %v588
    %v1603 = vunpack.c.h.b16 %v588
    %v1604 = vunpack.c.l.b16 %v589
    %v1605 = vunpack.c.h.b16 %v589
    %v1606 = vunpack.c.l.b16 %v590
    %v1607 = vunpack.c.h.b16 %v590
    %v1608 = vunpack.c.l.b16 %v591
    %v1609 = vunpack.c.h.b16 %v591
    %v1610 = vunpack.c.l.b16 %v592
    %v1611 = vunpack.c.h.b16 %v592
    %v1612 = vunpack.c.l.b16 %v593
    %v1613 = vunpack.c.h.b16 %v593
    %v1614 = vunpack.c.l.b16 %v594
    %v1615 = vunpack.c.h.b16 %v594
    %v1616 = vunpack.c.l.b16 %v595
    %v1617 = vunpack.c.h.b16 %v595
    %v1618 = vunpack.c.l.b16 %v596
    %v1619 = vunpack.c.h.b16 %v596
    %v1620 = vunpack.c.l.b16 %v597
    %v1621 = vunpack.c.h.b16 %v597
    %v1622 = vunpack.c.l.b16 %v598
    %v1623 = vunpack.c.h.b16 %v598
    %v1624 = vunpack.c.l.b16 %v599
    %v1625 = vunpack.c.h.b16 %v599
    %v1626 = vunpack.c.l.b16 %v600
    %v1627 = vunpack.c.h.b16 %v600
    %v1628 = vunpack.c.l.b16 %v601
    %v1629 = vunpack.c.h.b16 %v601
    %v1630 = vunpack.c.l.b16 %v602
    %v1631 = vunpack.c.h.b16 %v602
    %v1632 = vunpack.c.l.b16 %v603
    %v1633 = vunpack.c.h.b16 %v603
    %v1634 = vunpack.c.l.b16 %v604
    %v1635 = vunpack.c.h.b16 %v604
    %v1636 = vunpack.c.l.b16 %v605
    %v1637 = vunpack.c.h.b16 %v605
    %v1638 = vunpack.c.l.b16 %v606
    %v1639 = vunpack.c.h.b16 %v606
    %v1640 = vunpack.c.l.b16 %v607
    %v1641 = vunpack.c.h.b16 %v607
    %v1642 = vunpack.c.l.b16 %v608
    %v1643 = vunpack.c.h.b16 %v608
    %v1644 = vunpack.c.l.b16 %v609
    %v1645 = vunpack.c.h.b16 %v609
    %v1646 = vunpack.c.l.b16 %v610
    %v1647 = vunpack.c.h.b16 %v610
    %v1648 = vunpack.c.l.b16 %v611
    %v1649 = vunpack.c.h.b16 %v611
    %v1650 = vunpack.c.l.b16 %v612
    %v1651 = vunpack.c.h.b16 %v612
    %v1652 = vunpack.c.l.b16 %v613
    %v1653 = vunpack.c.h.b16 %v613
    %v1654 = vunpack.c.l.b16 %v614
    %v1655 = vunpack.c.h.b16 %v614
    %v1656 = vunpack.c.l.b16 %v615
    %v1657 = vunpack.c.h.b16 %v615
    %v1658 = vunpack.c.l.b16 %v616
    %v1659 = vunpack.c.h.b16 %v616
    %v1660 = vunpack.c.l.b16 %v617
    %v1661 = vunpack.c.h.b16 %v617
    %v1662 = vunpack.c.l.b16 %v618
    %v1663 = vunpack.c.h.b16 %v618
    %v1664 = vunpack.c.l.b16 %v619
    %v1665 = vunpack.c.h.b16 %v619
    %v1666 = vunpack.c.l.b16 %v620
    %v1667 = vunpack.c.h.b16 %v620
    %v1668 = vunpack.c.l.b16 %v621
    %v1669 = vunpack.c.h.b16 %v621
    %v1670 = vunpack.c.l.b16 %v622
    %v1671 = vunpack.c.h.b16 %v622
    %v1672 = vunpack.c.l.b16 %v623
    %v1673 = vunpack.c.h.b16 %v623
    %v1674 = vunpack.c.l.b16 %v624
    %v1675 = vunpack.c.h.b16 %v624
    %v1676 = vunpack.c.l.b16 %v625
    %v1677 = vunpack.c.h.b16 %v625
    %v1678 = vunpack.c.l.b16 %v626
    %v1679 = vunpack.c.h.b16 %v626
    %v1680 = vunpack.c.l.b16 %v627
    %v1681 = vunpack.c.h.b16 %v627
    %v1682 = vunpack.c.l.b16 %v628
    %v1683 = vunpack.c.h.b16 %v628
    %v1684 = vunpack.c.l.b16 %v629
    %v1685 = vunpack.c.h.b16 %v629
    %v1686 = vunpack.c.l.b16 %v630
    %v1687 = vunpack.c.h.b16 %v630
    %v1688 = vunpack.c.l.b16 %v631
    %v1689 = vunpack.c.h.b16 %v631
    %v1690 = vunpack.c.l.b16 %v632
    %v1691 = vunpack.c.h.b16 %v632
    %v1692 = vunpack.c.l.b16 %v633
    %v1693 = vunpack.c.h.b16 %v633
    %v1694 = vunpack.c.l.b16 %v634
    %v1695 = vunpack.c.h.b16 %v634
    %v1696 = vunpack.c.l.b16 %v635
    %v1697 = vunpack.c.h.b16 %v635
    %v1698 = vunpack.c.l.b16 %v636
    %v1699 = vunpack.c.h.b16 %v636
    %v1700 = vunpack.c.l.b16 %v637
    %v1701 = vunpack.c.h.b16 %v637
    %v1702 = vunpack.c.l.b16 %v638
    %v1703 = vunpack.c.h.b16 %v638
    %v1704 = vunpack.c.l.b16 %v639
    %v1705 = vunpack.c.h.b16 %v639
    %v1706 = vunpack.c.l.b16 %v640
    %v1707 = vunpack.c.h.b16 %v640
    %v1708 = vunpack.c.l.b16 %v641
    %v1709 = vunpack.c.h.b16 %v641
    %v1710 = vunpack.c.l.b16 %v642
    %v1711 = vunpack.c.h.b16 %v642
    %v1712 = vunpack.c.l.b16 %v643
    %v1713 = vunpack.c.h.b16 %v643
    %v1714 = vunpack.c.l.b16 %v644
    %v1715 = vunpack.c.h.b16 %v644
    %v1716 = vunpack.c.l.b16 %v645
    %v1717 = vunpack.c.h.b16 %v645
    %v1718 = vunpack.c.l.b16 %v646
    %v1719 = vunpack.c.h.b16 %v646
    %v1720 = vunpack.c.l.b16 %v647
    %v1721 = vunpack.c.h.b16 %v647
    %v1722 = vunpack.c.l.b16 %v648
    %v1723 = vunpack.c.h.b16 %v648
    %v1724 = vunpack.c.l.b16 %v649
    %v1725 = vunpack.c.h.b16 %v649
    %v1726 = vunpack.c.l.b16 %v650
    %v1727 = vunpack.c.h.b16 %v650
    %v1728 = vunpack.c.l.b16 %v651
    %v1729 = vunpack.c.h.b16 %v651
    %v1730 = vunpack.c.l.b16 %v652
    %v1731 = vunpack.c.h.b16 %v652
    %v1732 = vunpack.c.l.b16 %v653
    %v1733 = vunpack.c.h.b16 %v653
    %v1734 = vunpack.c.l.b16 %v654
    %v1735 = vunpack.c.h.b16 %v654
    %v1736 = vunpack.c.l.b16 %v655
    %v1737 = vunpack.c.h.b16 %v655
    %v1738 = vunpack.c.l.b16 %v656
    %v1739 = vunpack.c.h.b16 %v656
    %v1740 = vunpack.c.l.b16 %v657
    %v1741 = vunpack.c.h.b16 %v657
    %v1742 = vunpack.c.l.b16 %v658
    %v1743 = vunpack.c.h.b16 %v658
    %v1744 = vunpack.c.l.b16 %v659
    %v1745 = vunpack.c.h.b16 %v659
    %v1746 = vunpack.c.l.b16 %v660
    %v1747 = vunpack.c.h.b16 %v660
    %v1748 = vunpack.c.l.b16 %v661
    %v1749 = vunpack.c.h.b16 %v661
    %v1750 = vunpack.c.l.b16 %v662
    %v1751 = vunpack.c.h.b16 %v662
    %v1752 = vunpack.c.l.b16 %v663
    %v1753 = vunpack.c.h.b16 %v663
    %v1754 = vunpack.c.l.b16 %v664
    %v1755 = vunpack.c.h.b16 %v664
    %v1756 = vunpack.c.l.b16 %v665
    %v1757 = vunpack.c.h.b16 %v665
    %v1758 = vunpack.c.l.b16 %v666
    %v1759 = vunpack.c.h.b16 %v666
    %v1760 = vunpack.c.l.b16 %v667
    %v1761 = vunpack.c.h.b16 %v667
    %v1762 = vunpack.c.l.b16 %v668
    %v1763 = vunpack.c.h.b16 %v668
    %v1764 = vunpack.c.l.b16 %v669
    %v1765 = vunpack.c.h.b16 %v669
    %v1766 = vunpack.c.l.b16 %v670
    %v1767 = vunpack.c.h.b16 %v670
    %v1768 = vunpack.c.l.b16 %v671
    %v1769 = vunpack.c.h.b16 %v671
    %v1770 = vunpack.c.l.b16 %v672
    %v1771 = vunpack.c.h.b16 %v672
    %v1772 = vunpack.c.l.b16 %v673
    %v1773 = vunpack.c.h.b16 %v673
    %v1774 = vunpack.c.l.b16 %v674
    %v1775 = vunpack.c.h.b16 %v674
    %v1776 = vunpack.c.l.b16 %v675
    %v1777 = vunpack.c.h.b16 %v675
    %v1778 = vunpack.c.l.b16 %v676
    %v1779 = vunpack.c.h.b16 %v676
    %v1780 = vunpack.c.l.b16 %v677
    %v1781 = vunpack.c.h.b16 %v677
    %v1782 = vunpack.c.l.b16 %v678
    %v1783 = vunpack.c.h.b16 %v678
    %v1784 = vunpack.c.l.b16 %v679
    %v1785 = vunpack.c.h.b16 %v679
    %v1786 = vunpack.c.l.b16 %v680
    %v1787 = vunpack.c.h.b16 %v680
    %v1788 = vunpack.c.l.b16 %v681
    %v1789 = vunpack.c.h.b16 %v681
    %v1790 = vunpack.c.l.b16 %v682
    %v1791 = vunpack.c.h.b16 %v682
    %v1792 = vunpack.c.l.b16 %v683
    %v1793 = vunpack.c.h.b16 %v683
    %v1794 = vunpack.c.l.b16 %v684
    %v1795 = vunpack.c.h.b16 %v684
    %v1796 = vunpack.c.l.b16 %v685
    %v1797 = vunpack.c.h.b16 %v685
    %v1798 = vunpack.c.l.b16 %v686
    %v1799 = vunpack.c.h.b16 %v686
    %v1800 = vunpack.c.l.b16 %v687
    %v1801 = vunpack.c.h.b16 %v687
    %v1802 = vunpack.c.l.b16 %v688
    %v1803 = vunpack.c.h.b16 %v688
    %v1804 = vunpack.c.l.b16 %v689
    %v1805 = vunpack.c.h.b16 %v689
    %v1806 = vunpack.c.l.b16 %v690
    %v1807 = vunpack.c.h.b16 %v690
    %v1808 = vunpack.c.l.b16 %v691
    %v1809 = vunpack.c.h.b16 %v691
    %v1810 = vunpack.c.l.b16 %v692
    %v1811 = vunpack.c.h.b16 %v692
    %v1812 = vunpack.c.l.b16 %v693
    %v1813 = vunpack.c.h.b16 %v693
    %v1814 = vunpack.c.l.b16 %v694
    %v1815 = vunpack.c.h.b16 %v694
    %v1816 = vunpack.c.l.b16 %v695
    %v1817 = vunpack.c.h.b16 %v695
    %v1818 = vunpack.c.l.b16 %v696
    %v1819 = vunpack.c.h.b16 %v696
    %v1820 = vunpack.c.l.b16 %v697
    %v1821 = vunpack.c.h.b16 %v697
    %v1822 = vunpack.c.l.b16 %v698
    %v1823 = vunpack.c.h.b16 %v698
    %v1824 = vunpack.c.l.b16 %v699
    %v1825 = vunpack.c.h.b16 %v699
    %v1826 = vunpack.c.l.b16 %v700
    %v1827 = vunpack.c.h.b16 %v700
    %v1828 = vunpack.c.l.b16 %v701
    %v1829 = vunpack.c.h.b16 %v701
    %v1830 = vunpack.c.l.b16 %v702
    %v1831 = vunpack.c.h.b16 %v702
    %v1832 = vunpack.c.l.b16 %v703
    %v1833 = vunpack.c.h.b16 %v703
    %v1834 = vunpack.c.l.b16 %v704
    %v1835 = vunpack.c.h.b16 %v704
    %v1836 = vunpack.c.l.b16 %v705
    %v1837 = vunpack.c.h.b16 %v705
    %v1838 = vunpack.c.l.b16 %v706
    %v1839 = vunpack.c.h.b16 %v706
    %v1840 = vunpack.c.l.b16 %v707
    %v1841 = vunpack.c.h.b16 %v707
    %v1842 = vunpack.c.l.b16 %v708
    %v1843 = vunpack.c.h.b16 %v708
    %v1844 = vunpack.c.l.b16 %v709
    %v1845 = vunpack.c.h.b16 %v709
    %v1846 = vunpack.c.l.b16 %v710
    %v1847 = vunpack.c.h.b16 %v710
    %v1848 = vunpack.c.l.b16 %v711
    %v1849 = vunpack.c.h.b16 %v711
    %v1850 = vunpack.c.l.b16 %v712
    %v1851 = vunpack.c.h.b16 %v712
    %v1852 = vunpack.c.l.b16 %v713
    %v1853 = vunpack.c.h.b16 %v713
    %v1854 = vunpack.c.l.b16 %v714
    %v1855 = vunpack.c.h.b16 %v714
    %v1856 = vunpack.c.l.b16 %v715
    %v1857 = vunpack.c.h.b16 %v715
    %v1858 = vunpack.c.l.b16 %v716
    %v1859 = vunpack.c.h.b16 %v716
    %v1860 = vunpack.c.l.b16 %v717
    %v1861 = vunpack.c.h.b16 %v717
    %v1862 = vunpack.c.l.b16 %v718
    %v1863 = vunpack.c.h.b16 %v718
    %v1864 = vunpack.c.l.b16 %v719
    %v1865 = vunpack.c.h.b16 %v719
    %v1866 = vunpack.c.l.b16 %v720
    %v1867 = vunpack.c.h.b16 %v720
    %v1868 = vunpack.c.l.b16 %v721
    %v1869 = vunpack.c.h.b16 %v721
    %v1870 = vunpack.c.l.b16 %v722
    %v1871 = vunpack.c.h.b16 %v722
    %v1872 = vunpack.c.l.b16 %v723
    %v1873 = vunpack.c.h.b16 %v723
    %v1874 = vunpack.c.l.b16 %v724
    %v1875 = vunpack.c.h.b16 %v724
    %v1876 = vunpack.c.l.b16 %v725
    %v1877 = vunpack.c.h.b16 %v725
    %v1878 = vpack.c.b16 %v1112, %v1110
    %v1879 = vpack.c.b16 %v1113, %v1111
    %v1880 = vpack.c.b16 %v1116, %v1114
    %v1881 = vpack.c.b16 %v1117, %v1115
    %v1882 = vpack.c.b16 %v1120, %v1118
    %v1883 = vpack.c.b16 %v1121, %v1119
    %v1884 = vpack.c.b16 %v1124, %v1122
    %v1885 = vpack.c.b16 %v1125, %v1123
    %v1886 = vpack.c.b16 %v1128, %v1126
    %v1887 = vpack.c.b16 %v1129, %v1127
    %v1888 = vpack.c.b16 %v1132, %v1130
    %v1889 = vpack.c.b16 %v1133, %v1131
    %v1890 = vpack.c.b16 %v1136, %v1134
    %v1891 = vpack.c.b16 %v1137, %v1135
    %v1892 = vpack.c.b16 %v1140, %v1138
    %v1893 = vpack.c.b16 %v1141, %v1139
    %v1894 = vpack.c.b16 %v1144, %v1142
    %v1895 = vpack.c.b16 %v1145, %v1143
    %v1896 = vpack.c.b16 %v1148, %v1146
    %v1897 = vpack.c.b16 %v1149, %v1147
    %v1898 = vpack.c.b16 %v1152, %v1150
    %v1899 = vpack.c.b16 %v1153, %v1151
    %v1900 = vpack.c.b16 %v1156, %v1154
    %v1901 = vpack.c.b16 %v1157, %v1155
    %v1902 = vpack.c.b16 %v1160, %v1158
    %v1903 = vpack.c.b16 %v1161, %v1159
    %v1904 = vpack.c.b16 %v1164, %v1162
    %v1905 = vpack.c.b16 %v1165, %v1163
    %v1906 = vpack.c.b16 %v1168, %v1166
    %v1907 = vpack.c.b16 %v1169, %v1167
    %v1908 = vpack.c.b16 %v1172, %v1170
    %v1909 = vpack.c.b16 %v1173, %v1171
    %v1910 = vpack.c.b16 %v1176, %v1174
    %v1911 = vpack.c.b16 %v1177, %v1175
    %v1912 = vpack.c.b16 %v1180, %v1178
    %v1913 = vpack.c.b16 %v1181, %v1179
    %v1914 = vpack.c.b16 %v1184, %v1182
    %v1915 = vpack.c.b16 %v1185, %v1183
    %v1916 = vpack.c.b16 %v1188, %v1186
    %v1917 = vpack.c.b16 %v1189, %v1187
    %v1918 = vpack.c.b16 %v1192, %v1190
    %v1919 = vpack.c.b16 %v1193, %v1191
    %v1920 = vpack.c.b16 %v1196, %v1194
    %v1921 = vpack.c.b16 %v1197, %v1195
    %v1922 = vpack.c.b16 %v1200, %v1198
    %v1923 = vpack.c.b16 %v1201, %v1199
    %v1924 = vpack.c.b16 %v1204, %v1202
    %v1925 = vpack.c.b16 %v1205, %v1203
    %v1926 = vpack.c.b16 %v1208, %v1206
    %v1927 = vpack.c.b16 %v1209, %v1207
    %v1928 = vpack.c.b16 %v1212, %v1210
    %v1929 = vpack.c.b16 %v1213, %v1211
    %v1930 = vpack.c.b16 %v1216, %v1214
    %v1931 = vpack.c.b16 %v1217, %v1215
    %v1932 = vpack.c.b16 %v1220, %v1218
    %v1933 = vpack.c.b16 %v1221, %v1219
    %v1934 = vpack.c.b16 %v1224, %v1222
    %v1935 = vpack.c.b16 %v1225, %v1223
    %v1936 = vpack.c.b16 %v1228, %v1226
    %v1937 = vpack.c.b16 %v1229, %v1227
    %v1938 = vpack.c.b16 %v1232, %v1230
    %v1939 = vpack.c.b16 %v1233, %v1231
    %v1940 = vpack.c.b16 %v1236, %v1234
    %v1941 = vpack.c.b16 %v1237, %v1235
    %v1942 = vpack.c.b16 %v1240, %v1238
    %v1943 = vpack.c.b16 %v1241, %v1239
    %v1944 = vpack.c.b16 %v1244, %v1242
    %v1945 = vpack.c.b16 %v1245, %v1243
    %v1946 = vpack.c.b16 %v1248, %v1246
    %v1947 = vpack.c.b16 %v1249, %v1247
    %v1948 = vpack.c.b16 %v1252, %v1250
    %v1949 = vpack.c.b16 %v1253, %v1251
    %v1950 = vpack.c.b16 %v1256, %v1254
    %v1951 = vpack.c.b16 %v1257, %v1255
    %v1952 = vpack.c.b16 %v1260, %v1258
    %v1953 = vpack.c.b16 %v1261, %v1259
    %v1954 = vpack.c.b16 %v1264, %v1262
    %v1955 = vpack.c.b16 %v1265, %v1263
    %v1956 = vpack.c.b16 %v1268, %v1266
    %v1957 = vpack.c.b16 %v1269, %v1267
    %v1958 = vpack.c.b16 %v1272, %v1270
    %v1959 = vpack.c.b16 %v1273, %v1271
    %v1960 = vpack.c.b16 %v1276, %v1274
    %v1961 = vpack.c.b16 %v1277, %v1275
    %v1962 = vpack.c.b16 %v1280, %v1278
    %v1963 = vpack.c.b16 %v1281, %v1279
    %v1964 = vpack.c.b16 %v1284, %v1282
    %v1965 = vpack.c.b16 %v1285, %v1283
    %v1966 = vpack.c.b16 %v1288, %v1286
    %v1967 = vpack.c.b16 %v1289, %v1287
    %v1968 = vpack.c.b16 %v1292, %v1290
    %v1969 = vpack.c.b16 %v1293, %v1291
    %v1970 = vpack.c.b16 %v1296, %v1294
    %v1971 = vpack.c.b16 %v1297, %v1295
    %v1972 = vpack.c.b16 %v1300, %v1298
    %v1973 = vpack.c.b16 %v1301, %v1299
    %v1974 = vpack.c.b16 %v1304, %v1302
    %v1975 = vpack.c.b16 %v1305, %v1303
    %v1976 = vpack.c.b16 %v1308, %v1306
    %v1977 = vpack.c.b16 %v1309, %v1307
    %v1978 = vpack.c.b16 %v1312, %v1310
    %v1979 = vpack.c.b16 %v1313, %v1311
    %v1980 = vpack.c.b16 %v1316, %v1314
    %v1981 = vpack.c.b16 %v1317, %v1315
    %v1982 = vpack.c.b16 %v1320, %v1318
    %v1983 = vpack.c.b16 %v1321, %v1319
    %v1984 = vpack.c.b16 %v1324, %v1322
    %v1985 = vpack.c.b16 %v1325, %v1323
    %v1986 = vpack.c.b16 %v1328, %v1326
    %v1987 = vpack.c.b16 %v1329, %v1327
    %v1988 = vpack.c.b16 %v1332, %v1330
    %v1989 = vpack.c.b16 %v1333, %v1331
    %v1990 = vpack.c.b16 %v1336, %v1334
    %v1991 = vpack.c.b16 %v1337, %v1335
    %v1992 = vpack.c.b16 %v1340, %v1338
    %v1993 = vpack.c.b16 %v1341, %v1339
    %v1994 = vpack.c.b16 %v1344, %v1342
    %v1995 = vpack.c.b16 %v1345, %v1343
    %v1996 = vpack.c.b16 %v1348, %v1346
    %v1997 = vpack.c.b16 %v1349, %v1347
    %v1998 = vpack.c.b16 %v1352, %v1350
    %v1999 = vpack.c.b16 %v1353, %v1351
    %v2000 = vpack.c.b16 %v1356, %v1354
    %v2001 = vpack.c.b16 %v1357, %v1355
    %v2002 = vpack.c.b16 %v1360, %v1358
    %v2003 = vpack.c.b16 %v1361, %v1359
    %v2004 = vpack.c.b16 %v1364, %v1362
    %v2005 = vpack.c.b16 %v1365, %v1363
    %v2006 = vpack.c.b16 %v1368, %v1366
    %v2007 = vpack.c.b16 %v1369, %v1367
    %v2008 = vpack.c.b16 %v1372, %v1370
    %v2009 = vpack.c.b16 %v1373, %v1371
    %v2010 = vpack.c.b16 %v1376, %v1374
    %v2011 = vpack.c.b16 %v1377, %v1375
    %v2012 = vpack.c.b16 %v1380, %v1378
    %v2013 = vpack.c.b16 %v1381, %v1379
    %v2014 = vpack.c.b16 %v1384, %v1382
    %v2015 = vpack.c.b16 %v1385, %v1383
    %v2016 = vpack.c.b16 %v1388, %v1386
    %v2017 = vpack.c.b16 %v1389, %v1387
    %v2018 = vpack.c.b16 %v1392, %v1390
    %v2019 = vpack.c.b16 %v1393, %v1391
    %v2020 = vpack.c.b16 %v1396, %v1394
    %v2021 = vpack.c.b16 %v1397, %v1395
    %v2022 = vpack.c.b16 %v1400, %v1398
    %v2023 = vpack.c.b16 %v1401, %v1399
    %v2024 = vpack.c.b16 %v1404, %v1402
    %v2025 = vpack.c.b16 %v1405, %v1403
    %v2026 = vpack.c.b16 %v1408, %v1406
    %v2027 = vpack.c.b16 %v1409, %v1407
    %v2028 = vpack.c.b16 %v1412, %v1410
    %v2029 = vpack.c.b16 %v1413, %v1411
    %v2030 = vpack.c.b16 %v1416, %v1414
    %v2031 = vpack.c.b16 %v1417, %v1415
    %v2032 = vpack.c.b16 %v1420, %v1418
    %v2033 = vpack.c.b16 %v1421, %v1419
    %v2034 = vpack.c.b16 %v1424, %v1422
    %v2035 = vpack.c.b16 %v1425, %v1423
    %v2036 = vpack.c.b16 %v1428, %v1426
    %v2037 = vpack.c.b16 %v1429, %v1427
    %v2038 = vpack.c.b16 %v1432, %v1430
    %v2039 = vpack.c.b16 %v1433, %v1431
    %v2040 = vpack.c.b16 %v1436, %v1434
    %v2041 = vpack.c.b16 %v1437, %v1435
    %v2042 = vpack.c.b16 %v1440, %v1438
    %v2043 = vpack.c.b16 %v1441, %v1439
    %v2044 = vpack.c.b16 %v1444, %v1442
    %v2045 = vpack.c.b16 %v1445, %v1443
    %v2046 = vpack.c.b16 %v1448, %v1446
    %v2047 = vpack.c.b16 %v1449, %v1447
    %v2048 = vpack.c.b16 %v1452, %v1450
    %v2049 = vpack.c.b16 %v1453, %v1451
    %v2050 = vpack.c.b16 %v1456, %v1454
    %v2051 = vpack.c.b16 %v1457, %v1455
    %v2052 = vpack.c.b16 %v1460, %v1458
    %v2053 = vpack.c.b16 %v1461, %v1459
    %v2054 = vpack.c.b16 %v1464, %v1462
    %v2055 = vpack.c.b16 %v1465, %v1463
    %v2056 = vpack.c.b16 %v1468, %v1466
    %v2057 = vpack.c.b16 %v1469, %v1467
    %v2058 = vpack.c.b16 %v1472, %v1470
    %v2059 = vpack.c.b16 %v1473, %v1471
    %v2060 = vpack.c.b16 %v1476, %v1474
    %v2061 = vpack.c.b16 %v1477, %v1475
    %v2062 = vpack.c.b16 %v1480, %v1478
    %v2063 = vpack.c.b16 %v1481, %v1479
    %v2064 = vpack.c.b16 %v1484, %v1482
    %v2065 = vpack.c.b16 %v1485, %v1483
    %v2066 = vpack.c.b16 %v1488, %v1486
    %v2067 = vpack.c.b16 %v1489, %v1487
    %v2068 = vpack.c.b16 %v1492, %v1490
    %v2069 = vpack.c.b16 %v1493, %v1491
    %v2070 = vpack.c.b16 %v1496, %v1494
    %v2071 = vpack.c.b16 %v1497, %v1495
    %v2072 = vpack.c.b16 %v1500, %v1498
    %v2073 = vpack.c.b16 %v1501, %v1499
    %v2074 = vpack.c.b16 %v1504, %v1502
    %v2075 = vpack.c.b16 %v1505, %v1503
    %v2076 = vpack.c.b16 %v1508, %v1506
    %v2077 = vpack.c.b16 %v1509, %v1507
    %v2078 = vpack.c.b16 %v1512, %v1510
    %v2079 = vpack.c.b16 %v1513, %v1511
    %v2080 = vpack.c.b16 %v1516, %v1514
    %v2081 = vpack.c.b16 %v1517, %v1515
    %v2082 = vpack.c.b16 %v1520, %v1518
    %v2083 = vpack.c.b16 %v1521, %v1519
    %v2084 = vpack.c.b16 %v1524, %v1522
    %v2085 = vpack.c.b16 %v1525, %v1523
    %v2086 = vpack.c.b16 %v1528, %v1526
    %v2087 = vpack.c.b16 %v1529, %v1527
    %v2088 = vpack.c.b16 %v1532, %v1530
    %v2089 = vpack.c.b16 %v1533, %v1531
    %v2090 = vpack.c.b16 %v1536, %v1534
    %v2091 = vpack.c.b16 %v1537, %v1535
    %v2092 = vpack.c.b16 %v1540, %v1538
    %v2093 = vpack.c.b16 %v1541, %v1539
    %v2094 = vpack.c.b16 %v1544, %v1542
    %v2095 = vpack.c.b16 %v1545, %v1543
    %v2096 = vpack.c.b16 %v1548, %v1546
    %v2097 = vpack.c.b16 %v1549, %v1547
    %v2098 = vpack.c.b16 %v1552, %v1550
    %v2099 = vpack.c.b16 %v1553, %v1551
    %v2100 = vpack.c.b16 %v1556, %v1554
    %v2101 = vpack.c.b16 %v1557, %v1555
    %v2102 = vpack.c.b16 %v1560, %v1558
    %v2103 = vpack.c.b16 %v1561, %v1559
    %v2104 = vpack.c.b16 %v1564, %v1562
    %v2105 = vpack.c.b16 %v1565, %v1563
    %v2106 = vpack.c.b16 %v1568, %v1566
    %v2107 = vpack.c.b16 %v1569, %v1567
    %v2108 = vpack.c.b16 %v1572, %v1570
    %v2109 = vpack.c.b16 %v1573, %v1571
    %v2110 = vpack.c.b16 %v1576, %v1574
    %v2111 = vpack.c.b16 %v1577, %v1575
    %v2112 = vpack.c.b16 %v1580, %v1578
    %v2113 = vpack.c.b16 %v1581, %v1579
    %v2114 = vpack.c.b16 %v1584, %v1582
    %v2115 = vpack.c.b16 %v1585, %v1583
    %v2116 = vpack.c.b16 %v1588, %v1586
    %v2117 = vpack.c.b16 %v1589, %v1587
    %v2118 = vpack.c.b16 %v1592, %v1590
    %v2119 = vpack.c.b16 %v1593, %v1591
    %v2120 = vpack.c.b16 %v1596, %v1594
    %v2121 = vpack.c.b16 %v1597, %v1595
    %v2122 = vpack.c.b16 %v1600, %v1598
    %v2123 = vpack.c.b16 %v1601, %v1599
    %v2124 = vpack.c.b16 %v1604, %v1602
    %v2125 = vpack.c.b16 %v1605, %v1603
    %v2126 = vpack.c.b16 %v1608, %v1606
    %v2127 = vpack.c.b16 %v1609, %v1607
    %v2128 = vpack.c.b16 %v1612, %v1610
    %v2129 = vpack.c.b16 %v1613, %v1611
    %v2130 = vpack.c.b16 %v1616, %v1614
    %v2131 = vpack.c.b16 %v1617, %v1615
    %v2132 = vpack.c.b16 %v1620, %v1618
    %v2133 = vpack.c.b16 %v1621, %v1619
    %v2134 = vpack.c.b16 %v1624, %v1622
    %v2135 = vpack.c.b16 %v1625, %v1623
    %v2136 = vpack.c.b16 %v1628, %v1626
    %v2137 = vpack.c.b16 %v1629, %v1627
    %v2138 = vpack.c.b16 %v1632, %v1630
    %v2139 = vpack.c.b16 %v1633, %v1631
    %v2140 = vpack.c.b16 %v1636, %v1634
    %v2141 = vpack.c.b16 %v1637, %v1635
    %v2142 = vpack.c.b16 %v1640, %v1638
    %v2143 = vpack.c.b16 %v1641, %v1639
    %v2144 = vpack.c.b16 %v1644, %v1642
    %v2145 = vpack.c.b16 %v1645, %v1643
    %v2146 = vpack.c.b16 %v1648, %v1646
    %v2147 = vpack.c.b16 %v1649, %v1647
    %v2148 = vpack.c.b16 %v1652, %v1650
    %v2149 = vpack.c.b16 %v1653, %v1651
    %v2150 = vpack.c.b16 %v1656, %v1654
    %v2151 = vpack.c.b16 %v1657, %v1655
    %v2152 = vpack.c.b16 %v1660, %v1658
    %v2153 = vpack.c.b16 %v1661, %v1659
    %v2154 = vpack.c.b16 %v1664, %v1662
    %v2155 = vpack.c.b16 %v1665, %v1663
    %v2156 = vpack.c.b16 %v1668, %v1666
    %v2157 = vpack.c.b16 %v1669, %v1667
    %v2158 = vpack.c.b16 %v1672, %v1670
    %v2159 = vpack.c.b16 %v1673, %v1671
    %v2160 = vpack.c.b16 %v1676, %v1674
    %v2161 = vpack.c.b16 %v1677, %v1675
    %v2162 = vpack.c.b16 %v1680, %v1678
    %v2163 = vpack.c.b16 %v1681, %v1679
    %v2164 = vpack.c.b16 %v1684, %v1682
    %v2165 = vpack.c.b16 %v1685, %v1683
    %v2166 = vpack.c.b16 %v1688, %v1686
    %v2167 = vpack.c.b16 %v1689, %v1687
    %v2168 = vpack.c.b16 %v1692, %v1690
    %v2169 = vpack.c.b16 %v1693, %v1691
    %v2170 = vpack.c.b16 %v1696, %v1694
    %v2171 = vpack.c.b16 %v1697, %v1695
    %v2172 = vpack.c.b16 %v1700, %v1698
    %v2173 = vpack.c.b16 %v1701, %v1699
    %v2174 = vpack.c.b16 %v1704, %v1702
    %v2175 = vpack.c.b16 %v1705, %v1703
    %v2176 = vpack.c.b16 %v1708, %v1706
    %v2177 = vpack.c.b16 %v1709, %v1707
    %v2178 = vpack.c.b16 %v1712, %v1710
    %v2179 = vpack.c.b16 %v1713, %v1711
    %v2180 = vpack.c.b16 %v1716, %v1714
    %v2181 = vpack.c.b16 %v1717, %v1715
    %v2182 = vpack.c.b16 %v1720, %v1718
    %v2183 = vpack.c.b16 %v1721, %v1719
    %v2184 = vpack.c.b16 %v1724, %v1722
    %v2185 = vpack.c.b16 %v1725, %v1723
    %v2186 = vpack.c.b16 %v1728, %v1726
    %v2187 = vpack.c.b16 %v1729, %v1727
    %v2188 = vpack.c.b16 %v1732, %v1730
    %v2189 = vpack.c.b16 %v1733, %v1731
    %v2190 = vpack.c.b16 %v1736, %v1734
    %v2191 = vpack.c.b16 %v1737, %v1735
    %v2192 = vpack.c.b16 %v1740, %v1738
    %v2193 = vpack.c.b16 %v1741, %v1739
    %v2194 = vpack.c.b16 %v1744, %v1742
    %v2195 = vpack.c.b16 %v1745, %v1743
    %v2196 = vpack.c.b16 %v1748, %v1746
    %v2197 = vpack.c.b16 %v1749, %v1747
    %v2198 = vpack.c.b16 %v1752, %v1750
    %v2199 = vpack.c.b16 %v1753, %v1751
    %v2200 = vpack.c.b16 %v1756, %v1754
    %v2201 = vpack.c.b16 %v1757, %v1755
    %v2202 = vpack.c.b16 %v1760, %v1758
    %v2203 = vpack.c.b16 %v1761, %v1759
    %v2204 = vpack.c.b16 %v1764, %v1762
    %v2205 = vpack.c.b16 %v1765, %v1763
    %v2206 = vpack.c.b16 %v1768, %v1766
    %v2207 = vpack.c.b16 %v1769, %v1767
    %v2208 = vpack.c.b16 %v1772, %v1770
    %v2209 = vpack.c.b16 %v1773, %v1771
    %v2210 = vpack.c.b16 %v1776, %v1774
    %v2211 = vpack.c.b16 %v1777, %v1775
    %v2212 = vpack.c.b16 %v1780, %v1778
    %v2213 = vpack.c.b16 %v1781, %v1779
    %v2214 = vpack.c.b16 %v1784, %v1782
    %v2215 = vpack.c.b16 %v1785, %v1783
    %v2216 = vpack.c.b16 %v1788, %v1786
    %v2217 = vpack.c.b16 %v1789, %v1787
    %v2218 = vpack.c.b16 %v1792, %v1790
    %v2219 = vpack.c.b16 %v1793, %v1791
    %v2220 = vpack.c.b16 %v1796, %v1794
    %v2221 = vpack.c.b16 %v1797, %v1795
    %v2222 = vpack.c.b16 %v1800, %v1798
    %v2223 = vpack.c.b16 %v1801, %v1799
    %v2224 = vpack.c.b16 %v1804, %v1802
    %v2225 = vpack.c.b16 %v1805, %v1803
    %v2226 = vpack.c.b16 %v1808, %v1806
    %v2227 = vpack.c.b16 %v1809, %v1807
    %v2228 = vpack.c.b16 %v1812, %v1810
    %v2229 = vpack.c.b16 %v1813, %v1811
    %v2230 = vpack.c.b16 %v1816, %v1814
    %v2231 = vpack.c.b16 %v1817, %v1815
    %v2232 = vpack.c.b16 %v1820, %v1818
    %v2233 = vpack.c.b16 %v1821, %v1819
    %v2234 = vpack.c.b16 %v1824, %v1822
    %v2235 = vpack.c.b16 %v1825, %v1823
    %v2236 = vpack.c.b16 %v1828, %v1826
    %v2237 = vpack.c.b16 %v1829, %v1827
    %v2238 = vpack.c.b16 %v1832, %v1830
    %v2239 = vpack.c.b16 %v1833, %v1831
    %v2240 = vpack.c.b16 %v1836, %v1834
    %v2241 = vpack.c.b16 %v1837, %v1835
    %v2242 = vpack.c.b16 %v1840, %v1838
    %v2243 = vpack.c.b16 %v1841, %v1839
    %v2244 = vpack.c.b16 %v1844, %v1842
    %v2245 = vpack.c.b16 %v1845, %v1843
    %v2246 = vpack.c.b16 %v1848, %v1846
    %v2247 = vpack.c.b16 %v1849, %v1847
    %v2248 = vpack.c.b16 %v1852, %v1850
    %v2249 = vpack.c.b16 %v1853, %v1851
    %v2250 = vpack.c.b16 %v1856, %v1854
    %v2251 = vpack.c.b16 %v1857, %v1855
    %v2252 = vpack.c.b16 %v1860, %v1858
    %v2253 = vpack.c.b16 %v1861, %v1859
    %v2254 = vpack.c.b16 %v1864, %v1862
    %v2255 = vpack.c.b16 %v1865, %v1863
    %v2256 = vpack.c.b16 %v1868, %v1866
    %v2257 = vpack.c.b16 %v1869, %v1867
    %v2258 = vpack.c.b16 %v1872, %v1870
    %v2259 = vpack.c.b16 %v1873, %v1871
    %v2260 = vpack.c.b16 %v1876, %v1874
    %v2261 = vpack.c.b16 %v1877, %v1875
    %2646 = vmatprep.subr.bf16.mxu0 %v1879
    %2647 = vmatpush1.bf16.msra.mxu0 %v1878
    %2648 = vmatprep.subr.bf16.mxu0 %v1881
    %2649 = vmatpush1.bf16.msra.mxu0 %v1880
    %2650 = vmatprep.subr.bf16.mxu0 %v1883
    %2651 = vmatpush1.bf16.msra.mxu0 %v1882
    %2652 = vmatprep.subr.bf16.mxu0 %v1885
    %2653 = vmatpush1.bf16.msra.mxu0 %v1884
    %2654 = vmatprep.subr.bf16.mxu0 %v1887
    %2655 = vmatpush1.bf16.msra.mxu0 %v1886
    %2656 = vmatprep.subr.bf16.mxu0 %v1889
    %2657 = vmatpush1.bf16.msra.mxu0 %v1888
    %2658 = vmatprep.subr.bf16.mxu0 %v1891
    %2659 = vmatpush1.bf16.msra.mxu0 %v1890
    %2660 = vmatprep.subr.bf16.mxu0 %v1893
    %2661 = vmatpush1.bf16.msra.mxu0 %v1892
    %2662 = vmatprep.subr.bf16.mxu0 %v1895
    %2663 = vmatpush1.bf16.msra.mxu0 %v1894
    %2664 = vmatprep.subr.bf16.mxu0 %v1897
    %2665 = vmatpush1.bf16.msra.mxu0 %v1896
    %2666 = vmatprep.subr.bf16.mxu0 %v1899
    %2667 = vmatpush1.bf16.msra.mxu0 %v1898
    %2668 = vmatprep.subr.bf16.mxu0 %v1901
    %2669 = vmatpush1.bf16.msra.mxu0 %v1900
    %2670 = vmatprep.subr.bf16.mxu0 %v1903
    %2671 = vmatpush1.bf16.msra.mxu0 %v1902
    %2672 = vmatprep.subr.bf16.mxu0 %v1905
    %2673 = vmatpush1.bf16.msra.mxu0 %v1904
    %2674 = vmatprep.subr.bf16.mxu0 %v1907
    %2675 = vmatpush1.bf16.msra.mxu0 %v1906
    %2676 = vmatprep.subr.bf16.mxu0 %v1909
    %2677 = vmatpush1.bf16.msra.mxu0 %v1908
    %2678 = vmatprep.mubr.bf16.mxu0 %v319
    %2679 = vmatmul.mubr.bf16.gmra.mrb[0].mxu0 %v318
    %v2680 = vpop.f32.mrb[0].mxu0
    %v2681 = vadd.f32 0.0, %v2680
    %v2682 = vpop.f32.mrb[0].mxu0
    %v2683 = vadd.f32 0.0, %v2682
    %v2684 = vpop.f32.mrb[0].mxu0
    %v2685 = vpop.f32.mrb[0].mxu0
    %2686 = vdwg.mxu0
    %2687 = vmatprep.subr.bf16.mxu0 %v1911
    %2688 = vmatpush1.bf16.msra.mxu0 %v1910
    %2689 = vmatprep.subr.bf16.mxu0 %v1913
    %2690 = vmatpush1.bf16.msra.mxu0 %v1912
    %2691 = vmatprep.subr.bf16.mxu0 %v1915
    %2692 = vmatpush1.bf16.msra.mxu0 %v1914
    %2693 = vmatprep.subr.bf16.mxu0 %v1917
    %2694 = vmatpush1.bf16.msra.mxu0 %v1916
    %2695 = vmatprep.subr.bf16.mxu0 %v1919
    %2696 = vmatpush1.bf16.msra.mxu0 %v1918
    %2697 = vmatprep.subr.bf16.mxu0 %v1921
    %2698 = vmatpush1.bf16.msra.mxu0 %v1920
    %2699 = vmatprep.subr.bf16.mxu0 %v1923
    %2700 = vmatpush1.bf16.msra.mxu0 %v1922
    %2701 = vmatprep.subr.bf16.mxu0 %v1925
    %2702 = vmatpush1.bf16.msra.mxu0 %v1924
    %2703 = vmatprep.subr.bf16.mxu0 %v1927
    %2704 = vmatpush1.bf16.msra.mxu0 %v1926
    %2705 = vmatprep.subr.bf16.mxu0 %v1929
    %2706 = vmatpush1.bf16.msra.mxu0 %v1928
    %2707 = vmatprep.subr.bf16.mxu0 %v1931
    %2708 = vmatpush1.bf16.msra.mxu0 %v1930
    %2709 = vmatprep.subr.bf16.mxu0 %v1933
    %2710 = vmatpush1.bf16.msra.mxu0 %v1932
    %2711 = vmatprep.subr.bf16.mxu0 %v1935
    %2712 = vmatpush1.bf16.msra.mxu0 %v1934
    %2713 = vmatprep.subr.bf16.mxu0 %v1937
    %2714 = vmatpush1.bf16.msra.mxu0 %v1936
    %2715 = vmatprep.subr.bf16.mxu0 %v1939
    %2716 = vmatpush1.bf16.msra.mxu0 %v1938
    %2717 = vmatprep.subr.bf16.mxu0 %v1941
    %2718 = vmatpush1.bf16.msra.mxu0 %v1940
    %2719 = vmatprep.mubr.bf16.mxu0 %v321
    %2720 = vmatmul.mubr.bf16.gmra.mrb[0].mxu0 %v320
    %v2721 = vpop.f32.mrb[0].mxu0
    %v2722 = vadd.f32 %v2681, %v2721
    %v2723 = vpop.f32.mrb[0].mxu0
    %v2724 = vadd.f32 %v2683, %v2723
    %v2725 = vpop.f32.mrb[0].mxu0
    %v2726 = vpop.f32.mrb[0].mxu0
    %2727 = vdwg.mxu0
    %2728 = vmatprep.subr.bf16.mxu0 %v1943
    %2729 = vmatpush1.bf16.msra.mxu0 %v1942
    %2730 = vmatprep.subr.bf16.mxu0 %v1945
    %2731 = vmatpush1.bf16.msra.mxu0 %v1944
    %2732 = vmatprep.subr.bf16.mxu0 %v1947
    %2733 = vmatpush1.bf16.msra.mxu0 %v1946
    %2734 = vmatprep.subr.bf16.mxu0 %v1949
    %2735 = vmatpush1.bf16.msra.mxu0 %v1948
    %2736 = vmatprep.subr.bf16.mxu0 %v1951
    %2737 = vmatpush1.bf16.msra.mxu0 %v1950
    %2738 = vmatprep.subr.bf16.mxu0 %v1953
    %2739 = vmatpush1.bf16.msra.mxu0 %v1952
    %2740 = vmatprep.subr.bf16.mxu0 %v1955
    %2741 = vmatpush1.bf16.msra.mxu0 %v1954
    %2742 = vmatprep.subr.bf16.mxu0 %v1957
    %2743 = vmatpush1.bf16.msra.mxu0 %v1956
    %2744 = vmatprep.subr.bf16.mxu0 %v1959
    %2745 = vmatpush1.bf16.msra.mxu0 %v1958
    %2746 = vmatprep.subr.bf16.mxu0 %v1961
    %2747 = vmatpush1.bf16.msra.mxu0 %v1960
    %2748 = vmatprep.subr.bf16.mxu0 %v1963
    %2749 = vmatpush1.bf16.msra.mxu0 %v1962
    %2750 = vmatprep.subr.bf16.mxu0 %v1965
    %2751 = vmatpush1.bf16.msra.mxu0 %v1964
    %2752 = vmatprep.subr.bf16.mxu0 %v1967
    %2753 = vmatpush1.bf16.msra.mxu0 %v1966
    %2754 = vmatprep.subr.bf16.mxu0 %v1969
    %2755 = vmatpush1.bf16.msra.mxu0 %v1968
    %2756 = vmatprep.subr.bf16.mxu0 %v1971
    %2757 = vmatpush1.bf16.msra.mxu0 %v1970
    %2758 = vmatprep.subr.bf16.mxu0 %v1973
    %2759 = vmatpush1.bf16.msra.mxu0 %v1972
    %2760 = vmatprep.mubr.bf16.mxu0 %v323
    %2761 = vmatmul.mubr.bf16.gmra.mrb[0].mxu0 %v322
    %v2762 = vpop.f32.mrb[0].mxu0
    %v2763 = vadd.f32 %v2722, %v2762
    %v2764 = vpop.f32.mrb[0].mxu0
    %v2765 = vadd.f32 %v2724, %v2764
    %v2766 = vpop.f32.mrb[0].mxu0
    %v2767 = vpop.f32.mrb[0].mxu0
    %2768 = vdwg.mxu0
    %2769 = vmatprep.subr.bf16.mxu0 %v1975
    %2770 = vmatpush1.bf16.msra.mxu0 %v1974
    %2771 = vmatprep.subr.bf16.mxu0 %v1977
    %2772 = vmatpush1.bf16.msra.mxu0 %v1976
    %2773 = vmatprep.subr.bf16.mxu0 %v1979
    %2774 = vmatpush1.bf16.msra.mxu0 %v1978
    %2775 = vmatprep.subr.bf16.mxu0 %v1981
    %2776 = vmatpush1.bf16.msra.mxu0 %v1980
    %2777 = vmatprep.subr.bf16.mxu0 %v1983
    %2778 = vmatpush1.bf16.msra.mxu0 %v1982
    %2779 = vmatprep.subr.bf16.mxu0 %v1985
    %2780 = vmatpush1.bf16.msra.mxu0 %v1984
    %2781 = vmatprep.subr.bf16.mxu0 %v1987
    %2782 = vmatpush1.bf16.msra.mxu0 %v1986
    %2783 = vmatprep.subr.bf16.mxu0 %v1989
    %2784 = vmatpush1.bf16.msra.mxu0 %v1988
    %2785 = vmatprep.subr.bf16.mxu0 %v1991
    %2786 = vmatpush1.bf16.msra.mxu0 %v1990
    %2787 = vmatprep.subr.bf16.mxu0 %v1993
    %2788 = vmatpush1.bf16.msra.mxu0 %v1992
    %2789 = vmatprep.subr.bf16.mxu0 %v1995
    %2790 = vmatpush1.bf16.msra.mxu0 %v1994
    %2791 = vmatprep.subr.bf16.mxu0 %v1997
    %2792 = vmatpush1.bf16.msra.mxu0 %v1996
    %2793 = vmatprep.subr.bf16.mxu0 %v1999
    %2794 = vmatpush1.bf16.msra.mxu0 %v1998
    %2795 = vmatprep.subr.bf16.mxu0 %v2001
    %2796 = vmatpush1.bf16.msra.mxu0 %v2000
    %2797 = vmatprep.subr.bf16.mxu0 %v2003
    %2798 = vmatpush1.bf16.msra.mxu0 %v2002
    %2799 = vmatprep.subr.bf16.mxu0 %v2005
    %2800 = vmatpush1.bf16.msra.mxu0 %v2004
    %2801 = vmatprep.mubr.bf16.mxu0 %v325
    %2802 = vmatmul.mubr.bf16.gmra.mrb[0].mxu0 %v324
    %v2803 = vpop.f32.mrb[0].mxu0
    %v2804 = vadd.f32 %v2763, %v2803
    %v2805 = vpop.f32.mrb[0].mxu0
    %v2806 = vadd.f32 %v2765, %v2805
    %v2807 = vpop.f32.mrb[0].mxu0
    %v2808 = vpop.f32.mrb[0].mxu0
    %2809 = vdwg.mxu0
    %2810 = vmatprep.subr.bf16.mxu0 %v2007
    %2811 = vmatpush1.bf16.msra.mxu0 %v2006
    %2812 = vmatprep.subr.bf16.mxu0 %v2009
    %2813 = vmatpush1.bf16.msra.mxu0 %v2008
    %2814 = vmatprep.subr.bf16.mxu0 %v2011
    %2815 = vmatpush1.bf16.msra.mxu0 %v2010
    %2816 = vmatprep.subr.bf16.mxu0 %v2013
    %2817 = vmatpush1.bf16.msra.mxu0 %v2012
    %2818 = vmatprep.subr.bf16.mxu0 %v2015
    %2819 = vmatpush1.bf16.msra.mxu0 %v2014
    %2820 = vmatprep.subr.bf16.mxu0 %v2017
    %2821 = vmatpush1.bf16.msra.mxu0 %v2016
    %2822 = vmatprep.subr.bf16.mxu0 %v2019
    %2823 = vmatpush1.bf16.msra.mxu0 %v2018
    %2824 = vmatprep.subr.bf16.mxu0 %v2021
    %2825 = vmatpush1.bf16.msra.mxu0 %v2020
    %2826 = vmatprep.subr.bf16.mxu0 %v2023
    %2827 = vmatpush1.bf16.msra.mxu0 %v2022
    %2828 = vmatprep.subr.bf16.mxu0 %v2025
    %2829 = vmatpush1.bf16.msra.mxu0 %v2024
    %2830 = vmatprep.subr.bf16.mxu0 %v2027
    %2831 = vmatpush1.bf16.msra.mxu0 %v2026
    %2832 = vmatprep.subr.bf16.mxu0 %v2029
    %2833 = vmatpush1.bf16.msra.mxu0 %v2028
    %2834 = vmatprep.subr.bf16.mxu0 %v2031
    %2835 = vmatpush1.bf16.msra.mxu0 %v2030
    %2836 = vmatprep.subr.bf16.mxu0 %v2033
    %2837 = vmatpush1.bf16.msra.mxu0 %v2032
    %2838 = vmatprep.subr.bf16.mxu0 %v2035
    %2839 = vmatpush1.bf16.msra.mxu0 %v2034
    %2840 = vmatprep.subr.bf16.mxu0 %v2037
    %2841 = vmatpush1.bf16.msra.mxu0 %v2036
    %2842 = vmatprep.mubr.bf16.mxu0 %v327
    %2843 = vmatmul.mubr.bf16.gmra.mrb[0].mxu0 %v326
    %v2844 = vpop.f32.mrb[0].mxu0
    %v2845 = vadd.f32 %v2804, %v2844
    %v2846 = vpop.f32.mrb[0].mxu0
    %v2847 = vadd.f32 %v2806, %v2846
    %v2848 = vpop.f32.mrb[0].mxu0
    %v2849 = vpop.f32.mrb[0].mxu0
    %2850 = vdwg.mxu0
    %2851 = vmatprep.subr.bf16.mxu0 %v2039
    %2852 = vmatpush1.bf16.msra.mxu0 %v2038
    %2853 = vmatprep.subr.bf16.mxu0 %v2041
    %2854 = vmatpush1.bf16.msra.mxu0 %v2040
    %2855 = vmatprep.subr.bf16.mxu0 %v2043
    %2856 = vmatpush1.bf16.msra.mxu0 %v2042
    %2857 = vmatprep.subr.bf16.mxu0 %v2045
    %2858 = vmatpush1.bf16.msra.mxu0 %v2044
    %2859 = vmatprep.subr.bf16.mxu0 %v2047
    %2860 = vmatpush1.bf16.msra.mxu0 %v2046
    %2861 = vmatprep.subr.bf16.mxu0 %v2049
    %2862 = vmatpush1.bf16.msra.mxu0 %v2048
    %2863 = vmatprep.subr.bf16.mxu0 %v2051
    %2864 = vmatpush1.bf16.msra.mxu0 %v2050
    %2865 = vmatprep.subr.bf16.mxu0 %v2053
    %2866 = vmatpush1.bf16.msra.mxu0 %v2052
    %2867 = vmatprep.subr.bf16.mxu0 %v2055
    %2868 = vmatpush1.bf16.msra.mxu0 %v2054
    %2869 = vmatprep.subr.bf16.mxu0 %v2057
    %2870 = vmatpush1.bf16.msra.mxu0 %v2056
    %2871 = vmatprep.subr.bf16.mxu0 %v2059
    %2872 = vmatpush1.bf16.msra.mxu0 %v2058
    %2873 = vmatprep.subr.bf16.mxu0 %v2061
    %2874 = vmatpush1.bf16.msra.mxu0 %v2060
    %2875 = vmatprep.subr.bf16.mxu0 %v2063
    %2876 = vmatpush1.bf16.msra.mxu0 %v2062
    %2877 = vmatprep.subr.bf16.mxu0 %v2065
    %2878 = vmatpush1.bf16.msra.mxu0 %v2064
    %2879 = vmatprep.subr.bf16.mxu0 %v2067
    %2880 = vmatpush1.bf16.msra.mxu0 %v2066
    %2881 = vmatprep.subr.bf16.mxu0 %v2069
    %2882 = vmatpush1.bf16.msra.mxu0 %v2068
    %2883 = vmatprep.mubr.bf16.mxu0 %v329
    %2884 = vmatmul.mubr.bf16.gmra.mrb[0].mxu0 %v328
    %v2885 = vpop.f32.mrb[0].mxu0
    %v2886 = vadd.f32 %v2845, %v2885
    %v2887 = vpop.f32.mrb[0].mxu0
    %v2888 = vadd.f32 %v2847, %v2887
    %v2889 = vpop.f32.mrb[0].mxu0
    %v2890 = vpop.f32.mrb[0].mxu0
    %2891 = vdwg.mxu0
    %2892 = vmatprep.subr.bf16.mxu0 %v2071
    %2893 = vmatpush1.bf16.msra.mxu0 %v2070
    %2894 = vmatprep.subr.bf16.mxu0 %v2073
    %2895 = vmatpush1.bf16.msra.mxu0 %v2072
    %2896 = vmatprep.subr.bf16.mxu0 %v2075
    %2897 = vmatpush1.bf16.msra.mxu0 %v2074
    %2898 = vmatprep.subr.bf16.mxu0 %v2077
    %2899 = vmatpush1.bf16.msra.mxu0 %v2076
    %2900 = vmatprep.subr.bf16.mxu0 %v2079
    %2901 = vmatpush1.bf16.msra.mxu0 %v2078
    %2902 = vmatprep.subr.bf16.mxu0 %v2081
    %2903 = vmatpush1.bf16.msra.mxu0 %v2080
    %2904 = vmatprep.subr.bf16.mxu0 %v2083
    %2905 = vmatpush1.bf16.msra.mxu0 %v2082
    %2906 = vmatprep.subr.bf16.mxu0 %v2085
    %2907 = vmatpush1.bf16.msra.mxu0 %v2084
    %2908 = vmatprep.subr.bf16.mxu0 %v2087
    %2909 = vmatpush1.bf16.msra.mxu0 %v2086
    %2910 = vmatprep.subr.bf16.mxu0 %v2089
    %2911 = vmatpush1.bf16.msra.mxu0 %v2088
    %2912 = vmatprep.subr.bf16.mxu0 %v2091
    %2913 = vmatpush1.bf16.msra.mxu0 %v2090
    %2914 = vmatprep.subr.bf16.mxu0 %v2093
    %2915 = vmatpush1.bf16.msra.mxu0 %v2092
    %2916 = vmatprep.subr.bf16.mxu0 %v2095
    %2917 = vmatpush1.bf16.msra.mxu0 %v2094
    %2918 = vmatprep.subr.bf16.mxu0 %v2097
    %2919 = vmatpush1.bf16.msra.mxu0 %v2096
    %2920 = vmatprep.subr.bf16.mxu0 %v2099
    %2921 = vmatpush1.bf16.msra.mxu0 %v2098
    %2922 = vmatprep.subr.bf16.mxu0 %v2101
    %2923 = vmatpush1.bf16.msra.mxu0 %v2100
    %2924 = vmatprep.mubr.bf16.mxu0 %v331
    %2925 = vmatmul.mubr.bf16.gmra.mrb[0].mxu0 %v330
    %v2926 = vpop.f32.mrb[0].mxu0
    %v2927 = vadd.f32 %v2886, %v2926
    %v2928 = vpop.f32.mrb[0].mxu0
    %v2929 = vadd.f32 %v2888, %v2928
    %v2930 = vpop.f32.mrb[0].mxu0
    %v2931 = vpop.f32.mrb[0].mxu0
    %2932 = vdwg.mxu0
    %2933 = vmatprep.subr.bf16.mxu0 %v2103
    %2934 = vmatpush1.bf16.msra.mxu0 %v2102
    %2935 = vmatprep.subr.bf16.mxu0 %v2105
    %2936 = vmatpush1.bf16.msra.mxu0 %v2104
    %2937 = vmatprep.subr.bf16.mxu0 %v2107
    %2938 = vmatpush1.bf16.msra.mxu0 %v2106
    %2939 = vmatprep.subr.bf16.mxu0 %v2109
    %2940 = vmatpush1.bf16.msra.mxu0 %v2108
    %2941 = vmatprep.subr.bf16.mxu0 %v2111
    %2942 = vmatpush1.bf16.msra.mxu0 %v2110
    %2943 = vmatprep.subr.bf16.mxu0 %v2113
    %2944 = vmatpush1.bf16.msra.mxu0 %v2112
    %2945 = vmatprep.subr.bf16.mxu0 %v2115
    %2946 = vmatpush1.bf16.msra.mxu0 %v2114
    %2947 = vmatprep.subr.bf16.mxu0 %v2117
    %2948 = vmatpush1.bf16.msra.mxu0 %v2116
    %2949 = vmatprep.subr.bf16.mxu0 %v2119
    %2950 = vmatpush1.bf16.msra.mxu0 %v2118
    %2951 = vmatprep.subr.bf16.mxu0 %v2121
    %2952 = vmatpush1.bf16.msra.mxu0 %v2120
    %2953 = vmatprep.subr.bf16.mxu0 %v2123
    %2954 = vmatpush1.bf16.msra.mxu0 %v2122
    %2955 = vmatprep.subr.bf16.mxu0 %v2125
    %2956 = vmatpush1.bf16.msra.mxu0 %v2124
    %2957 = vmatprep.subr.bf16.mxu0 %v2127
    %2958 = vmatpush1.bf16.msra.mxu0 %v2126
    %2959 = vmatprep.subr.bf16.mxu0 %v2129
    %2960 = vmatpush1.bf16.msra.mxu0 %v2128
    %2961 = vmatprep.subr.bf16.mxu0 %v2131
    %2962 = vmatpush1.bf16.msra.mxu0 %v2130
    %2963 = vmatprep.subr.bf16.mxu0 %v2133
    %2964 = vmatpush1.bf16.msra.mxu0 %v2132
    %2965 = vmatprep.mubr.bf16.mxu0 %v333
    %2966 = vmatmul.mubr.bf16.gmra.mrb[0].mxu0 %v332
    %v2967 = vpop.f32.mrb[0].mxu0
    %v2968 = vadd.f32 %v2927, %v2967
    %v2969 = vpop.f32.mrb[0].mxu0
    %v2970 = vadd.f32 %v2929, %v2969
    %v2971 = vpop.f32.mrb[0].mxu0
    %v2972 = vpop.f32.mrb[0].mxu0
    %2973 = vdwg.mxu0
    %2974 = vmatprep.subr.bf16.mxu0 %v2135
    %2975 = vmatpush1.bf16.msra.mxu0 %v2134
    %2976 = vmatprep.subr.bf16.mxu0 %v2137
    %2977 = vmatpush1.bf16.msra.mxu0 %v2136
    %2978 = vmatprep.subr.bf16.mxu0 %v2139
    %2979 = vmatpush1.bf16.msra.mxu0 %v2138
    %2980 = vmatprep.subr.bf16.mxu0 %v2141
    %2981 = vmatpush1.bf16.msra.mxu0 %v2140
    %2982 = vmatprep.subr.bf16.mxu0 %v2143
    %2983 = vmatpush1.bf16.msra.mxu0 %v2142
    %2984 = vmatprep.subr.bf16.mxu0 %v2145
    %2985 = vmatpush1.bf16.msra.mxu0 %v2144
    %2986 = vmatprep.subr.bf16.mxu0 %v2147
    %2987 = vmatpush1.bf16.msra.mxu0 %v2146
    %2988 = vmatprep.subr.bf16.mxu0 %v2149
    %2989 = vmatpush1.bf16.msra.mxu0 %v2148
    %2990 = vmatprep.subr.bf16.mxu0 %v2151
    %2991 = vmatpush1.bf16.msra.mxu0 %v2150
    %2992 = vmatprep.subr.bf16.mxu0 %v2153
    %2993 = vmatpush1.bf16.msra.mxu0 %v2152
    %2994 = vmatprep.subr.bf16.mxu0 %v2155
    %2995 = vmatpush1.bf16.msra.mxu0 %v2154
    %2996 = vmatprep.subr.bf16.mxu0 %v2157
    %2997 = vmatpush1.bf16.msra.mxu0 %v2156
    %2998 = vmatprep.subr.bf16.mxu0 %v2159
    %2999 = vmatpush1.bf16.msra.mxu0 %v2158
    %3000 = vmatprep.subr.bf16.mxu0 %v2161
    %3001 = vmatpush1.bf16.msra.mxu0 %v2160
    %3002 = vmatprep.subr.bf16.mxu0 %v2163
    %3003 = vmatpush1.bf16.msra.mxu0 %v2162
    %3004 = vmatprep.subr.bf16.mxu0 %v2165
    %3005 = vmatpush1.bf16.msra.mxu0 %v2164
    %3006 = vmatprep.mubr.bf16.mxu0 %v335
    %3007 = vmatmul.mubr.bf16.gmra.mrb[0].mxu0 %v334
    %v3008 = vpop.f32.mrb[0].mxu0
    %v3009 = vadd.f32 %v2968, %v3008
    %v3010 = vpop.f32.mrb[0].mxu0
    %v3011 = vadd.f32 %v2970, %v3010
    %v3012 = vpop.f32.mrb[0].mxu0
    %v3013 = vpop.f32.mrb[0].mxu0
    %3014 = vdwg.mxu0
    %3015 = vmatprep.subr.bf16.mxu0 %v2167
    %3016 = vmatpush1.bf16.msra.mxu0 %v2166
    %3017 = vmatprep.subr.bf16.mxu0 %v2169
    %3018 = vmatpush1.bf16.msra.mxu0 %v2168
    %3019 = vmatprep.subr.bf16.mxu0 %v2171
    %3020 = vmatpush1.bf16.msra.mxu0 %v2170
    %3021 = vmatprep.subr.bf16.mxu0 %v2173
    %3022 = vmatpush1.bf16.msra.mxu0 %v2172
    %3023 = vmatprep.subr.bf16.mxu0 %v2175
    %3024 = vmatpush1.bf16.msra.mxu0 %v2174
    %3025 = vmatprep.subr.bf16.mxu0 %v2177
    %3026 = vmatpush1.bf16.msra.mxu0 %v2176
    %3027 = vmatprep.subr.bf16.mxu0 %v2179
    %3028 = vmatpush1.bf16.msra.mxu0 %v2178
    %3029 = vmatprep.subr.bf16.mxu0 %v2181
    %3030 = vmatpush1.bf16.msra.mxu0 %v2180
    %3031 = vmatprep.subr.bf16.mxu0 %v2183
    %3032 = vmatpush1.bf16.msra.mxu0 %v2182
    %3033 = vmatprep.subr.bf16.mxu0 %v2185
    %3034 = vmatpush1.bf16.msra.mxu0 %v2184
    %3035 = vmatprep.subr.bf16.mxu0 %v2187
    %3036 = vmatpush1.bf16.msra.mxu0 %v2186
    %3037 = vmatprep.subr.bf16.mxu0 %v2189
    %3038 = vmatpush1.bf16.msra.mxu0 %v2188
    %3039 = vmatprep.subr.bf16.mxu0 %v2191
    %3040 = vmatpush1.bf16.msra.mxu0 %v2190
    %3041 = vmatprep.subr.bf16.mxu0 %v2193
    %3042 = vmatpush1.bf16.msra.mxu0 %v2192
    %3043 = vmatprep.subr.bf16.mxu0 %v2195
    %3044 = vmatpush1.bf16.msra.mxu0 %v2194
    %3045 = vmatprep.subr.bf16.mxu0 %v2197
    %3046 = vmatpush1.bf16.msra.mxu0 %v2196
    %3047 = vmatprep.mubr.bf16.mxu0 %v337
    %3048 = vmatmul.mubr.bf16.gmra.mrb[0].mxu0 %v336
    %v3049 = vpop.f32.mrb[0].mxu0
    %v3050 = vadd.f32 %v3009, %v3049
    %v3051 = vpop.f32.mrb[0].mxu0
    %v3052 = vadd.f32 %v3011, %v3051
    %v3053 = vpop.f32.mrb[0].mxu0
    %v3054 = vpop.f32.mrb[0].mxu0
    %3055 = vdwg.mxu0
    %3056 = vmatprep.subr.bf16.mxu0 %v2199
    %3057 = vmatpush1.bf16.msra.mxu0 %v2198
    %3058 = vmatprep.subr.bf16.mxu0 %v2201
    %3059 = vmatpush1.bf16.msra.mxu0 %v2200
    %3060 = vmatprep.subr.bf16.mxu0 %v2203
    %3061 = vmatpush1.bf16.msra.mxu0 %v2202
    %3062 = vmatprep.subr.bf16.mxu0 %v2205
    %3063 = vmatpush1.bf16.msra.mxu0 %v2204
    %3064 = vmatprep.subr.bf16.mxu0 %v2207
    %3065 = vmatpush1.bf16.msra.mxu0 %v2206
    %3066 = vmatprep.subr.bf16.mxu0 %v2209
    %3067 = vmatpush1.bf16.msra.mxu0 %v2208
    %3068 = vmatprep.subr.bf16.mxu0 %v2211
    %3069 = vmatpush1.bf16.msra.mxu0 %v2210
    %3070 = vmatprep.subr.bf16.mxu0 %v2213
    %3071 = vmatpush1.bf16.msra.mxu0 %v2212
    %3072 = vmatprep.subr.bf16.mxu0 %v2215
    %3073 = vmatpush1.bf16.msra.mxu0 %v2214
    %3074 = vmatprep.subr.bf16.mxu0 %v2217
    %3075 = vmatpush1.bf16.msra.mxu0 %v2216
    %3076 = vmatprep.subr.bf16.mxu0 %v2219
    %3077 = vmatpush1.bf16.msra.mxu0 %v2218
    %3078 = vmatprep.subr.bf16.mxu0 %v2221
    %3079 = vmatpush1.bf16.msra.mxu0 %v2220
    %3080 = vmatprep.subr.bf16.mxu0 %v2223
    %3081 = vmatpush1.bf16.msra.mxu0 %v2222
    %3082 = vmatprep.subr.bf16.mxu0 %v2225
    %3083 = vmatpush1.bf16.msra.mxu0 %v2224
    %3084 = vmatprep.subr.bf16.mxu0 %v2227
    %3085 = vmatpush1.bf16.msra.mxu0 %v2226
    %3086 = vmatprep.subr.bf16.mxu0 %v2229
    %3087 = vmatpush1.bf16.msra.mxu0 %v2228
    %3088 = vmatprep.mubr.bf16.mxu0 %v339
    %3089 = vmatmul.mubr.bf16.gmra.mrb[0].mxu0 %v338
    %v3090 = vpop.f32.mrb[0].mxu0
    %v3091 = vadd.f32 %v3050, %v3090
    %v3092 = vpop.f32.mrb[0].mxu0
    %v3093 = vadd.f32 %v3052, %v3092
    %v3094 = vpop.f32.mrb[0].mxu0
    %v3095 = vpop.f32.mrb[0].mxu0
    %3096 = vdwg.mxu0
    %3097 = vmatprep.subr.bf16.mxu0 %v2231
    %3098 = vmatpush1.bf16.msra.mxu0 %v2230
    %3099 = vmatprep.subr.bf16.mxu0 %v2233
    %3100 = vmatpush1.bf16.msra.mxu0 %v2232
    %3101 = vmatprep.subr.bf16.mxu0 %v2235
    %3102 = vmatpush1.bf16.msra.mxu0 %v2234
    %3103 = vmatprep.subr.bf16.mxu0 %v2237
    %3104 = vmatpush1.bf16.msra.mxu0 %v2236
    %3105 = vmatprep.subr.bf16.mxu0 %v2239
    %3106 = vmatpush1.bf16.msra.mxu0 %v2238
    %3107 = vmatprep.subr.bf16.mxu0 %v2241
    %3108 = vmatpush1.bf16.msra.mxu0 %v2240
    %3109 = vmatprep.subr.bf16.mxu0 %v2243
    %3110 = vmatpush1.bf16.msra.mxu0 %v2242
    %3111 = vmatprep.subr.bf16.mxu0 %v2245
    %3112 = vmatpush1.bf16.msra.mxu0 %v2244
    %3113 = vmatprep.subr.bf16.mxu0 %v2247
    %3114 = vmatpush1.bf16.msra.mxu0 %v2246
    %3115 = vmatprep.subr.bf16.mxu0 %v2249
    %3116 = vmatpush1.bf16.msra.mxu0 %v2248
    %3117 = vmatprep.subr.bf16.mxu0 %v2251
    %3118 = vmatpush1.bf16.msra.mxu0 %v2250
    %3119 = vmatprep.subr.bf16.mxu0 %v2253
    %3120 = vmatpush1.bf16.msra.mxu0 %v2252
    %3121 = vmatprep.subr.bf16.mxu0 %v2255
    %3122 = vmatpush1.bf16.msra.mxu0 %v2254
    %3123 = vmatprep.subr.bf16.mxu0 %v2257
    %3124 = vmatpush1.bf16.msra.mxu0 %v2256
    %3125 = vmatprep.subr.bf16.mxu0 %v2259
    %3126 = vmatpush1.bf16.msra.mxu0 %v2258
    %3127 = vmatprep.subr.bf16.mxu0 %v2261
    %3128 = vmatpush1.bf16.msra.mxu0 %v2260
    %3129 = vmatprep.mubr.bf16.mxu0 %v341
    %3130 = vmatmul.mubr.bf16.gmra.mrb[0].mxu0 %v340
    %v3131 = vpop.f32.mrb[0].mxu0
    %v3132 = vadd.f32 %v3091, %v3131
    %v3133 = vpop.f32.mrb[0].mxu0
    %v3134 = vadd.f32 %v3093, %v3133
    %v3135 = vpop.f32.mrb[0].mxu0
    %v3136 = vpop.f32.mrb[0].mxu0
    %3137 = vdwg.mxu0
    %v3138 = vpack.c.bf16 %v3132, %v3132
    %v3139 = vpack.c.bf16 %v3134, %v3134
    %v3140 = vld [vmem:[%s2] sm:$0xf]
    %v3141 = vld [vmem:[%s2 + $0x4] sm:$0xf]
    %v3142 = vld [vmem:[%s2 + $0x8] sm:$0xf]
    %v3143 = vld [vmem:[%s2 + $0xc] sm:$0xf]
    %v3144 = vld [vmem:[%s2 + $0x10] sm:$0xf]
    %v3145 = vld [vmem:[%s2 + $0x14] sm:$0xf]
    %v3146 = vld [vmem:[%s2 + $0x18] sm:$0xf]
    %v3147 = vld [vmem:[%s2 + $0x1c] sm:$0xf]
    %v3148 = vld [vmem:[%s2 + $0x20] sm:$0xf]
    %v3149 = vld [vmem:[%s2 + $0x24] sm:$0xf]
    %v3150 = vld [vmem:[%s2 + $0x28] sm:$0xf]
    %v3151 = vld [vmem:[%s2 + $0x2c] sm:$0xf]
    %v3152 = vld [vmem:[%s2 + $0x30] sm:$0xf]
    %v3153 = vld [vmem:[%s2 + $0x34] sm:$0xf]
    %v3154 = vld [vmem:[%s2 + $0x38] sm:$0xf]
    %v3155 = vld [vmem:[%s2 + $0x3c] sm:$0xf]
    %v3156 = vld [vmem:[%s2 + $0x40] sm:$0xf]
    %v3157 = vld [vmem:[%s2 + $0x44] sm:$0xf]
    %v3158 = vld [vmem:[%s2 + $0x48] sm:$0xf]
    %v3159 = vld [vmem:[%s2 + $0x4c] sm:$0xf]
    %v3160 = vld [vmem:[%s2 + $0x50] sm:$0xf]
    %v3161 = vld [vmem:[%s2 + $0x54] sm:$0xf]
    %v3162 = vld [vmem:[%s2 + $0x58] sm:$0xf]
    %v3163 = vld [vmem:[%s2 + $0x5c] sm:$0xf]
    %v3164 = vld [vmem:[%s2 + $0x60] sm:$0xf]
    %v3165 = vld [vmem:[%s2 + $0x64] sm:$0xf]
    %v3166 = vld [vmem:[%s2 + $0x68] sm:$0xf]
    %v3167 = vld [vmem:[%s2 + $0x6c] sm:$0xf]
    %v3168 = vld [vmem:[%s2 + $0x70] sm:$0xf]
    %v3169 = vld [vmem:[%s2 + $0x74] sm:$0xf]
    %v3170 = vld [vmem:[%s2 + $0x78] sm:$0xf]
    %v3171 = vld [vmem:[%s2 + $0x7c] sm:$0xf]
    %v3204 = vunpack.c.l.b16 %v3140
    %v3205 = vunpack.c.l.b16 %v3141
    %v3206 = vunpack.c.l.b16 %v3142
    %v3207 = vunpack.c.l.b16 %v3143
    %v3208 = vunpack.c.l.b16 %v3144
    %v3209 = vunpack.c.l.b16 %v3145
    %v3210 = vunpack.c.l.b16 %v3146
    %v3211 = vunpack.c.l.b16 %v3147
    %v3212 = vunpack.c.l.b16 %v3148
    %v3213 = vunpack.c.l.b16 %v3149
    %v3214 = vunpack.c.l.b16 %v3150
    %v3215 = vunpack.c.l.b16 %v3151
    %v3216 = vunpack.c.l.b16 %v3152
    %v3217 = vunpack.c.l.b16 %v3153
    %v3218 = vunpack.c.l.b16 %v3154
    %v3219 = vunpack.c.l.b16 %v3155
    %v3220 = vunpack.c.l.b16 %v3156
    %v3221 = vunpack.c.l.b16 %v3157
    %v3222 = vunpack.c.l.b16 %v3158
    %v3223 = vunpack.c.l.b16 %v3159
    %v3224 = vunpack.c.l.b16 %v3160
    %v3225 = vunpack.c.l.b16 %v3161
    %v3226 = vunpack.c.l.b16 %v3162
    %v3227 = vunpack.c.l.b16 %v3163
    %v3228 = vunpack.c.l.b16 %v3164
    %v3229 = vunpack.c.l.b16 %v3165
    %v3230 = vunpack.c.l.b16 %v3166
    %v3231 = vunpack.c.l.b16 %v3167
    %v3232 = vunpack.c.l.b16 %v3168
    %v3233 = vunpack.c.l.b16 %v3169
    %v3234 = vunpack.c.l.b16 %v3170
    %v3235 = vunpack.c.l.b16 %v3171
    %v3236 = vpack.c.b16 %v3205, %v3204
    %v3237 = vpack.c.b16 %v3207, %v3206
    %v3238 = vpack.c.b16 %v3209, %v3208
    %v3239 = vpack.c.b16 %v3211, %v3210
    %v3240 = vpack.c.b16 %v3213, %v3212
    %v3241 = vpack.c.b16 %v3215, %v3214
    %v3242 = vpack.c.b16 %v3217, %v3216
    %v3243 = vpack.c.b16 %v3219, %v3218
    %v3244 = vpack.c.b16 %v3221, %v3220
    %v3245 = vpack.c.b16 %v3223, %v3222
    %v3246 = vpack.c.b16 %v3225, %v3224
    %v3247 = vpack.c.b16 %v3227, %v3226
    %v3248 = vpack.c.b16 %v3229, %v3228
    %v3249 = vpack.c.b16 %v3231, %v3230
    %v3250 = vpack.c.b16 %v3233, %v3232
    %v3251 = vpack.c.b16 %v3235, %v3234
    %3268 = vmatprep.subr.bf16.mxu0 0
    %3269 = vmatpush1.bf16.msra.mxu0 %v3236
    %3270 = vmatprep.subr.bf16.mxu0 0
    %3271 = vmatpush1.bf16.msra.mxu0 %v3237
    %3272 = vmatprep.subr.bf16.mxu0 0
    %3273 = vmatpush1.bf16.msra.mxu0 %v3238
    %3274 = vmatprep.subr.bf16.mxu0 0
    %3275 = vmatpush1.bf16.msra.mxu0 %v3239
    %3276 = vmatprep.subr.bf16.mxu0 0
    %3277 = vmatpush1.bf16.msra.mxu0 %v3240
    %3278 = vmatprep.subr.bf16.mxu0 0
    %3279 = vmatpush1.bf16.msra.mxu0 %v3241
    %3280 = vmatprep.subr.bf16.mxu0 0
    %3281 = vmatpush1.bf16.msra.mxu0 %v3242
    %3282 = vmatprep.subr.bf16.mxu0 0
    %3283 = vmatpush1.bf16.msra.mxu0 %v3243
    %3284 = vmatprep.subr.bf16.mxu0 0
    %3285 = vmatpush1.bf16.msra.mxu0 %v3244
    %3286 = vmatprep.subr.bf16.mxu0 0
    %3287 = vmatpush1.bf16.msra.mxu0 %v3245
    %3288 = vmatprep.subr.bf16.mxu0 0
    %3289 = vmatpush1.bf16.msra.mxu0 %v3246
    %3290 = vmatprep.subr.bf16.mxu0 0
    %3291 = vmatpush1.bf16.msra.mxu0 %v3247
    %3292 = vmatprep.subr.bf16.mxu0 0
    %3293 = vmatpush1.bf16.msra.mxu0 %v3248
    %3294 = vmatprep.subr.bf16.mxu0 0
    %3295 = vmatpush1.bf16.msra.mxu0 %v3249
    %3296 = vmatprep.subr.bf16.mxu0 0
    %3297 = vmatpush1.bf16.msra.mxu0 %v3250
    %3298 = vmatprep.subr.bf16.mxu0 0
    %3299 = vmatpush1.bf16.msra.mxu0 %v3251
    %3300 = vmatprep.mubr.bf16.mxu0 %v3139
    %3301 = vmatmul.mubr.bf16.gmra.mrb[0].mxu0 %v3138
    %v3302 = vpop.f32.mrb[0].mxu0
    %v3303 = vadd.f32 0.0, %v3302
    %v3304 = vpop.f32.mrb[0].mxu0
    %v3305 = vpop.f32.mrb[0].mxu0
    %v3306 = vpop.f32.mrb[0].mxu0
    %3307 = vdwg.mxu0
    %vm3308 = vcmask 80896
    %v3309 = vsel %vm3308, %v3303, -inf
    %3310 = vmax.xlane.f32.xlu0 %v3309
    %v3311 = vpop.xlane.xlu0 %3310
    %v3312 = vsub.f32 %v3303, %v3311
    %v3313 = vmul.f32 %v3312, 1.442695
    %v3314 = vpow.pop %v3313
    %v3315 = vsel %vm3308, %v3314, 0.0
    %3316 = vadd.xlane.f32.xlu0 %v3315
    %v3317 = vpop.xlane.xlu0 %3316
    %v3318 = vlog2.pop %v3317
    %v3319 = vmul.f32 %v3318, 0.6931472
    %v3320 = vsub.f32 %v3312, %v3319
    %3321 = vst.msk [vmem:[#allocation5] sm:$0xff] %vm3308, %v3320
    // Predicated region
    $region18: #{fcnet_forward.1} parent=1 // pred_check
      _
    $region19: #{fcnet_forward.1} parent=1 // pred_check_branch
      %3323 = sbr.rel (0) target = $region21
    $region20: #{fcnet_forward.1} parent=1 // pred_region
      %s3325 = ssub.s32 128, 32
      %3326 = vsyncadd [#allocation4], %s3325
      %s3327 = sshll.u32 [#allocation5], 4
      %s3328 = int_to_ptr.vmem [resolvable:$true] %s3327
      %3333 = dma.vmem_to_hbm [thread:$0]  %s3328, 32, %s3, [#allocation4], 32, 32, 2
    $region21: #{fcnet_forward.1} parent=1 // pred_fallthru
      _
    // Predicated region
    $region22: #{fcnet_forward.1} parent=1 // pred_check
      _
    $region23: #{fcnet_forward.1} parent=1 // pred_check_branch
      %3335 = sbr.rel (0) target = $region25
    $region24: #{fcnet_forward.1} parent=1 // pred_region
      %3336 = dma.done [#allocation4], 128
    $region25: #{fcnet_forward.1} parent=1 // pred_fallthru
      _
    %3337 = vsyncpa [#allocation3], 1
    %3338 = vsyncpa [#allocation4], 1

</llo_original>
